<compile_context>
chip_gen: v7x
topology: tpu7x:2x2x1
jax: 0.10.0
libtpu: 0.0.40
codegen_flags: <defaults>
</compile_context>

<pallas_src>
import functools

import jax
import jax.numpy as jnp
from jax import lax
from jax.experimental import pallas as pl
from jax.experimental.pallas import tpu as pltpu

GROUPS = 8
EPS = 1e-5


def _up1d_kernel(x_ref, skip_ref, tb_ref,
                 wue_ref, wuo_ref, wc1_ref, wc2_ref,
                 vecs_ref, pfold_ref,
                 out_ref, *, L, b_tile, c_in, c_out):
    f32 = jnp.float32
    bf16 = jnp.bfloat16
    Lb = b_tile * L                       # lanes per stream (b_tile samples, sample-major)

    x = x_ref[0]                          # (C_in, Lb)
    skip = skip_ref[0]                    # (C_in, 2*Lb): [:, :Lb]=even stream, [:, Lb:]=odd
    tb = tb_ref[0]                        # (C_out, b_tile) per-sample time-embedding bias

    # ---- hoisted per-sample boundary masks (one iota + compare per grid step) ----
    col = lax.broadcasted_iota(jnp.int32, (1, L), 1)
    not_first = jnp.where(col == 0, 0.0, 1.0).astype(f32)      # 0 at each sample's col 0
    not_last = jnp.where(col == L - 1, 0.0, 1.0).astype(f32)   # 0 at each sample's col L-1
    if b_tile > 1:
        not_first = jnp.concatenate([not_first] * b_tile, axis=1)
        not_last = jnp.concatenate([not_last] * b_tile, axis=1)

    def shift_r(h):   # result[:, j] = h[:, j-1] within a sample, 0 at sample starts
        return pltpu.roll(h, shift=1, axis=1) * not_first

    def shift_l(h):   # result[:, j] = h[:, j+1] within a sample, 0 at sample ends
        return pltpu.roll(h, shift=Lb - 1, axis=1) * not_last

    def mxu(w_ref, rhs):   # bf16 operands, f32 accumulation (MXU-native on v5e/v6e/v7x)
        return jnp.dot(w_ref[...], rhs.astype(bf16), preferred_element_type=f32)

    # ---- packed per-channel vectors: [b_up | b1 | g1 | be1 | b2 | g2 | be2 | pad] ----
    vecs = vecs_ref[...]
    bu = vecs[:c_in, 0:1]
    b1, g1, be1 = vecs[:c_out, 1:2], vecs[:c_out, 2:3], vecs[:c_out, 3:4]
    b2, g2, be2 = vecs[:c_out, 4:5], vecs[:c_out, 5:6], vecs[:c_out, 6:7]

    # ---- ConvTranspose1d(C_in -> C_in, k=4, s=2, p=1) as even / odd output streams ----
    # out[2m]   = W1^T x[m] + W3^T x[m-1] ; out[2m+1] = W2^T x[m] + W0^T x[m+1]
    e = mxu(wue_ref, jnp.concatenate([x, shift_r(x)], axis=0)) + bu     # (C_in, Lb)
    o = mxu(wuo_ref, jnp.concatenate([x, shift_l(x)], axis=0)) + bu     # (C_in, Lb)

    # ---- channel concat with skip (module: cat([upconv(x), skip], dim=1)) ----
    he = jnp.concatenate([e, skip[:, :Lb]], axis=0)                     # (2*C_in, Lb)
    ho = jnp.concatenate([o, skip[:, Lb:]], axis=0)

    def per_sample_sum(a):   # (C, Lb) -> (C, b_tile): lane-segment sum per sample
        if b_tile == 1:
            return jnp.sum(a, axis=1, keepdims=True)
        return jnp.concatenate(
            [jnp.sum(a[:, b * L:(b + 1) * L], axis=1, keepdims=True)
             for b in range(b_tile)], axis=1)

    def per_sample_bcast(v, rows):   # (C, b_tile) -> (C, Lb)
        if b_tile == 1:
            return jnp.broadcast_to(v, (rows, Lb))
        return jnp.concatenate(
            [jnp.broadcast_to(v[:, b:b + 1], (rows, L)) for b in range(b_tile)], axis=1)

    def conv3(ae, ao, wc_ref, b):
        # Conv1d(k=3, pad=1) on even/odd streams: one wide-K matmul per stream built
        # from stacked shifts (taps j-1, j, j+1); no lane-axis concatenates.
        ye = mxu(wc_ref, jnp.concatenate([shift_r(ao), ae, ao], axis=0)) + b
        yo = mxu(wc_ref, jnp.concatenate([ae, ao, shift_l(ae)], axis=0)) + b
        return ye, yo

    def gn_silu(ye, yo, gamma, beta):
        # Two-pass GroupNorm statistics in f32; pfold is block-diagonal with
        # 1/(group_size * 2L) per in-group entry, so one small matmul per statistic
        # folds channels -> per-group means for all b_tile samples at once.
        s = per_sample_sum(ye) + per_sample_sum(yo)                       # (C_out, b_tile)
        mean = jnp.dot(pfold_ref[...], s, preferred_element_type=f32)
        mean_b = per_sample_bcast(mean, c_out)
        de, do = ye - mean_b, yo - mean_b
        sq = per_sample_sum(de * de) + per_sample_sum(do * do)
        var = jnp.dot(pfold_ref[...], sq, preferred_element_type=f32)
        scale_b = per_sample_bcast(gamma * lax.rsqrt(var + EPS), c_out)
        ze = de * scale_b + beta
        zo = do * scale_b + beta
        return ze * jax.nn.sigmoid(ze), zo * jax.nn.sigmoid(zo)

    he, ho = gn_silu(*conv3(he, ho, wc1_ref, b1), g1, be1)
    he, ho = gn_silu(*conv3(he, ho, wc2_ref, b2), g2, be2)

    # ---- + time-embedding bias; write both streams (lane-dense, tile-aligned halves) ----
    tb_b = per_sample_bcast(tb, c_out)
    out_ref[0, :, :Lb] = (he + tb_b).astype(out_ref.dtype)
    out_ref[0, :, Lb:] = (ho + tb_b).astype(out_ref.dtype)


def up1d_block(x, skip, t_emb, params, *, b_tile=None, out_dtype=None):
    """x: (N, C_in, L), skip: (N, C_in, 2L), t_emb: (N, emb) -> (N, C_out, 2L)."""
    N, C_in, L = x.shape
    L2 = 2 * L
    # TODO(synk): the F.pad branch for an upconv/skip length mismatch is not implemented;
    #             this wrapper requires skip length == 2*L (the common UNet case).
    assert skip.shape == (N, C_in, L2), "skip length must equal 2*L_in"
    C_out = params["w1"].shape[0]
    assert C_out % GROUPS == 0, "GroupNorm(8) requires out_channels % 8 == 0"
    assert params["w1"].shape[1] == 2 * C_in
    f32, bf16 = jnp.float32, jnp.bfloat16
    out_dtype = out_dtype or x.dtype   # emit bf16 here if the consumer accepts it

    # b_tile samples per grid step, stacked along lanes.  Default keeps >= 2 grid steps
    # (b_tile = N/2) so both v7x TensorCores get work; pass b_tile=N for one fat step
    # on single-TC chips (v5e/v6e).
    if b_tile is None:
        b_tile = 1 if N == 1 else max(d for d in range(1, N // 2 + 1) if N % d == 0)
    assert N % b_tile == 0, "b_tile must divide the batch"
    n_steps = N // b_tile
    Lb = b_tile * L

    # ---- parameter packing (trace-time layout plumbing, folded by XLA) ----
    w_up = params["w_up"]                                                  # (C_in, C_in, 4)
    wue = jnp.concatenate([w_up[:, :, 1].T, w_up[:, :, 3].T], axis=1).astype(bf16)
    wuo = jnp.concatenate([w_up[:, :, 2].T, w_up[:, :, 0].T], axis=1).astype(bf16)

    def stack_taps(w):   # (Co, Ci, 3) -> (Co, 3*Ci), blocks [k=0 | k=1 | k=2]
        return jnp.concatenate([w[:, :, 0], w[:, :, 1], w[:, :, 2]], axis=1)

    wc1 = stack_taps(params["w1"]).astype(bf16)                            # (C_out, 6*C_in)
    wc2 = stack_taps(params["w2"]).astype(bf16)                            # (C_out, 3*C_out)

    cmax = max(C_in, C_out)

    def as_col(v):
        return jnp.pad(v.astype(f32), (0, cmax - v.shape[0]))[:, None]

    vecs = jnp.concatenate(
        [as_col(params["b_up"]), as_col(params["b1"]), as_col(params["g1"]),
         as_col(params["be1"]), as_col(params["b2"]), as_col(params["g2"]),
         as_col(params["be2"]), jnp.zeros((cmax, 1), f32)], axis=1)        # (cmax, 8)

    gsz = C_out // GROUPS
    grp = jnp.arange(C_out) // gsz
    pfold = (grp[:, None] == grp[None, :]).astype(f32) / float(gsz * L2)   # (C_out, C_out)

    # time-embedding projection hoisted out of the kernel (one batched XLA matmul)
    tproj = (t_emb @ params["wt"].T + params["bt"]).astype(f32)            # (N, C_out)
    tproj = jnp.transpose(tproj.reshape(n_steps, b_tile, C_out), (0, 2, 1))

    # batch -> lanes (sample-major) and even/odd stream-blocking of skip.
    # TODO(synk): move this (de)interleave into the kernel (XLU lane shuffle) if C/L
    #             grow to sizes where the extra wrapper-side HBM pass matters.
    x_st = jnp.transpose(x.reshape(n_steps, b_tile, C_in, L),
                         (0, 2, 1, 3)).reshape(n_steps, C_in, Lb).astype(f32)
    skip_st = jnp.transpose(skip.reshape(n_steps, b_tile, C_in, L, 2),
                            (0, 2, 4, 1, 3)).reshape(n_steps, C_in, 2 * Lb).astype(f32)

    inputs = (x_st, skip_st, tproj, wue, wuo, wc1, wc2, vecs, pfold)

    def const_spec(arr):
        return pl.BlockSpec(arr.shape, lambda s, _d=arr.ndim: (0,) * _d)

    in_specs = [
        pl.BlockSpec((1, C_in, Lb), lambda s: (s, 0, 0)),
        pl.BlockSpec((1, C_in, 2 * Lb), lambda s: (s, 0, 0)),
        pl.BlockSpec((1, C_out, b_tile), lambda s: (s, 0, 0)),
    ] + [const_spec(a) for a in inputs[3:]]
    out_specs = pl.BlockSpec((1, C_out, 2 * Lb), lambda s: (s, 0, 0))

    kernel = functools.partial(_up1d_kernel, L=L, b_tile=b_tile, c_in=C_in, c_out=C_out)

    flops = (N * L * (8 * C_in * C_in + 24 * C_out * C_in + 12 * C_out * C_out)
             + n_steps * 8 * C_out * C_out * b_tile)
    transcendentals = N * 4 * C_out * L + n_steps * 4 * C_out * b_tile
    bytes_accessed = (4 * (x_st.size + skip_st.size + tproj.size + vecs.size + pfold.size)
                      + 2 * (wue.size + wuo.size + wc1.size + wc2.size)
                      + N * C_out * L2 * jnp.dtype(out_dtype).itemsize)

    out_st = pl.pallas_call(
        kernel,
        out_shape=jax.ShapeDtypeStruct((n_steps, C_out, 2 * Lb), out_dtype),
        grid_spec=pltpu.PrefetchScalarGridSpec(
            num_scalar_prefetch=0,
            grid=(n_steps,),
            in_specs=in_specs,
            out_specs=out_specs),
        compiler_params=pltpu.CompilerParams(
            dimension_semantics=("parallel",)),
        cost_estimate=pl.CostEstimate(flops=int(flops),
                                      transcendentals=int(transcendentals),
                                      bytes_accessed=int(bytes_accessed)),
    )(*inputs)

    # un-do the step / batch / stream blocking (cheap XLA layout plumbing at these sizes)
    out = jnp.transpose(out_st.reshape(n_steps, C_out, 2, b_tile, L),
                        (0, 3, 1, 4, 2)).reshape(N, C_out, L2)
    return out


def make_params(key, c_in, c_out, emb):
    ks = jax.random.split(key, 12)
    f = jnp.float32
    return {
        # PyTorch-native layouts
        "w_up": 0.1 * jax.random.normal(ks[0], (c_in, c_in, 4), f),  # ConvTranspose1d (in,out,k)
        "b_up": 0.1 * jax.random.normal(ks[1], (c_in,), f),
        "w1": 0.1 * jax.random.normal(ks[2], (c_out, 2 * c_in, 3), f),
        "b1": 0.1 * jax.random.normal(ks[3], (c_out,), f),
        "g1": 1.0 + 0.05 * jax.random.normal(ks[4], (c_out,), f),
        "be1": 0.05 * jax.random.normal(ks[5], (c_out,), f),
        "w2": 0.1 * jax.random.normal(ks[6], (c_out, c_out, 3), f),
        "b2": 0.1 * jax.random.normal(ks[7], (c_out,), f),
        "g2": 1.0 + 0.05 * jax.random.normal(ks[8], (c_out,), f),
        "be2": 0.05 * jax.random.normal(ks[9], (c_out,), f),
        "wt": 0.1 * jax.random.normal(ks[10], (c_out, emb), f),      # Linear weight (out, in)
        "bt": 0.1 * jax.random.normal(ks[11], (c_out,), f),
    }


def reference_forward(x, skip, t_emb, params):
    """Pure-JAX reference mirroring the PyTorch Up1DBlock."""
    hp = lax.Precision.HIGHEST

    def conv_transpose1d(h, w_iok, b):
        w = jnp.transpose(jnp.flip(w_iok, axis=2), (1, 0, 2))     # (out, in, k), flipped
        y = lax.conv_general_dilated(h, w, window_strides=(1,), padding=[(2, 2)],
                                     lhs_dilation=(2,),
                                     dimension_numbers=("NCH", "OIH", "NCH"),
                                     precision=hp)
        return y + b[None, :, None]

    def conv1d(h, w_oik, b):
        y = lax.conv_general_dilated(h, w_oik, (1,), [(1, 1)],
                                     dimension_numbers=("NCH", "OIH", "NCH"),
                                     precision=hp)
        return y + b[None, :, None]

    def gn(h, gamma, beta):
        N, C, L = h.shape
        hg = h.reshape(N, GROUPS, (C // GROUPS) * L)
        m = hg.mean(axis=2, keepdims=True)
        v = ((hg - m) ** 2).mean(axis=2, keepdims=True)
        hn = ((hg - m) / jnp.sqrt(v + EPS)).reshape(N, C, L)
        return hn * gamma[None, :, None] + beta[None, :, None]

    def silu(h):
        return h * jax.nn.sigmoid(h)

    xu = conv_transpose1d(x, params["w_up"], params["b_up"])
    h = jnp.concatenate([xu, skip], axis=1)
    h = silu(gn(conv1d(h, params["w1"], params["b1"]), params["g1"], params["be1"]))
    h = silu(gn(conv1d(h, params["w2"], params["b2"]), params["g2"], params["be2"]))
    tb = t_emb @ params["wt"].T + params["bt"]
    return h + tb[:, :, None]


if __name__ == "__main__":
    N, C_in, C_out, L, EMB = 4, 8, 16, 128, 32

    key = jax.random.PRNGKey(0)
    kx, ks, kt, kp = jax.random.split(key, 4)
    x = jax.random.normal(kx, (N, C_in, L), jnp.float32)
    skip = jax.random.normal(ks, (N, C_in, 2 * L), jnp.float32)
    t_emb = jax.random.normal(kt, (N, EMB), jnp.float32)
    params = make_params(kp, C_in, C_out, EMB)

    # default b_tile: N/2 samples per grid step -> 2 "parallel" steps (keeps both v7x TCs busy)
    out = jax.block_until_ready(up1d_block(x, skip, t_emb, params))

    ref = reference_forward(x, skip, t_emb, params)
    assert out.shape == (N, C_out, 2 * L)
    max_err = float(jnp.max(jnp.abs(out - ref)))
    # bf16 MXU operands with f32 accumulation / f32 GroupNorm statistics
    assert jnp.allclose(out, ref, atol=2e-2, rtol=2e-2), f"max abs err = {max_err}"

    print("KERNEL_OK")
</pallas_src>

<mosaic_0001>
module attributes {stable_mosaic.version = 11 : i64} {
  func.func @_up1d_kernel(%arg0: i32, %arg1: memref<1x8x256xf32, #tpu.memory_space<vmem>>, %arg2: memref<1x8x512xf32, #tpu.memory_space<vmem>>, %arg3: memref<1x16x2xf32, #tpu.memory_space<vmem>>, %arg4: memref<8x16xbf16, #tpu.memory_space<vmem>>, %arg5: memref<8x16xbf16, #tpu.memory_space<vmem>>, %arg6: memref<16x48xbf16, #tpu.memory_space<vmem>>, %arg7: memref<16x48xbf16, #tpu.memory_space<vmem>>, %arg8: memref<16x8xf32, #tpu.memory_space<vmem>>, %arg9: memref<16x16xf32, #tpu.memory_space<vmem>>, %arg10: memref<1x16x512xf32, #tpu.memory_space<vmem>>) attributes {dimension_semantics = [#tpu.dimension_semantics<parallel>], iteration_bounds = array<i64: 2>, scalar_prefetch = 0 : i64, scratch_operands = 0 : i64, tpu.core_type = #tpu.core_type<tc>, window_params = [{transform_indices = @transform_0, window_bounds = array<i64: 1, 8, 256>}, {transform_indices = @transform_1, window_bounds = array<i64: 1, 8, 512>}, {transform_indices = @transform_2, window_bounds = array<i64: 1, 16, 2>}, {pipeline_mode = #tpu.pipeline_mode<synchronous>, transform_indices = @transform_3, window_bounds = array<i64: 8, 16>}, {pipeline_mode = #tpu.pipeline_mode<synchronous>, transform_indices = @transform_4, window_bounds = array<i64: 8, 16>}, {pipeline_mode = #tpu.pipeline_mode<synchronous>, transform_indices = @transform_5, window_bounds = array<i64: 16, 48>}, {pipeline_mode = #tpu.pipeline_mode<synchronous>, transform_indices = @transform_6, window_bounds = array<i64: 16, 48>}, {pipeline_mode = #tpu.pipeline_mode<synchronous>, transform_indices = @transform_7, window_bounds = array<i64: 16, 8>}, {pipeline_mode = #tpu.pipeline_mode<synchronous>, transform_indices = @transform_8, window_bounds = array<i64: 16, 16>}, {transform_indices = @transform_9, window_bounds = array<i64: 1, 16, 512>}]} {
    %c0 = arith.constant 0 : index
    %c0_0 = arith.constant 0 : index
    %c0_1 = arith.constant 0 : index
    %0 = vector.load %arg1[%c0, %c0_0, %c0_1] : memref<1x8x256xf32, #tpu.memory_space<vmem>>, vector<1x8x256xf32>
    %1 = vector.shape_cast %0 : vector<1x8x256xf32> to vector<8x256xf32>
    %c0_2 = arith.constant 0 : index
    %c0_3 = arith.constant 0 : index
    %c0_4 = arith.constant 0 : index
    %2 = vector.load %arg2[%c0_2, %c0_3, %c0_4] : memref<1x8x512xf32, #tpu.memory_space<vmem>>, vector<1x8x512xf32>
    %3 = vector.shape_cast %2 : vector<1x8x512xf32> to vector<8x512xf32>
    %c0_5 = arith.constant 0 : index
    %c0_6 = arith.constant 0 : index
    %c0_7 = arith.constant 0 : index
    %4 = vector.load %arg3[%c0_5, %c0_6, %c0_7] : memref<1x16x2xf32, #tpu.memory_space<vmem>>, vector<1x16x2xf32>
    %5 = vector.shape_cast %4 : vector<1x16x2xf32> to vector<16x2xf32>
    %6 = tpu.iota {dimensions = array<i32: 1>} : vector<1x128xi32>
    %c0_i32 = arith.constant 0 : i32
    %7 = vector.broadcast %c0_i32 : i32 to vector<1x128xi32>
    %8 = arith.cmpi eq, %6, %7 : vector<1x128xi32>
    %cst = arith.constant 0.000000e+00 : f32
    %cst_8 = arith.constant 1.000000e+00 : f32
    %9 = vector.broadcast %cst : f32 to vector<1x128xf32>
    %10 = vector.broadcast %cst_8 : f32 to vector<1x128xf32>
    %11 = arith.select %8, %9, %10 : vector<1x128xi1>, vector<1x128xf32>
    %c127_i32 = arith.constant 127 : i32
    %12 = vector.broadcast %c127_i32 : i32 to vector<1x128xi32>
    %13 = arith.cmpi eq, %6, %12 : vector<1x128xi32>
    %cst_9 = arith.constant 0.000000e+00 : f32
    %cst_10 = arith.constant 1.000000e+00 : f32
    %14 = vector.broadcast %cst_9 : f32 to vector<1x128xf32>
    %15 = vector.broadcast %cst_10 : f32 to vector<1x128xf32>
    %16 = arith.select %13, %14, %15 : vector<1x128xi1>, vector<1x128xf32>
    %17 = tpu.concatenate %11, %11 in 1 : vector<1x128xf32>, vector<1x128xf32> -> vector<1x256xf32>
    %18 = tpu.concatenate %16, %16 in 1 : vector<1x128xf32>, vector<1x128xf32> -> vector<1x256xf32>
    %c0_11 = arith.constant 0 : index
    %c0_12 = arith.constant 0 : index
    %19 = vector.load %arg8[%c0_11, %c0_12] : memref<16x8xf32, #tpu.memory_space<vmem>>, vector<16x8xf32>
    %20 = vector.extract_strided_slice %19 {offsets = [0, 0], sizes = [8, 1], strides = [1, 1]} : vector<16x8xf32> to vector<8x1xf32>
    %21 = vector.extract_strided_slice %19 {offsets = [0, 1], sizes = [16, 1], strides = [1, 1]} : vector<16x8xf32> to vector<16x1xf32>
    %22 = vector.extract_strided_slice %19 {offsets = [0, 2], sizes = [16, 1], strides = [1, 1]} : vector<16x8xf32> to vector<16x1xf32>
    %23 = vector.extract_strided_slice %19 {offsets = [0, 3], sizes = [16, 1], strides = [1, 1]} : vector<16x8xf32> to vector<16x1xf32>
    %24 = vector.extract_strided_slice %19 {offsets = [0, 4], sizes = [16, 1], strides = [1, 1]} : vector<16x8xf32> to vector<16x1xf32>
    %25 = vector.extract_strided_slice %19 {offsets = [0, 5], sizes = [16, 1], strides = [1, 1]} : vector<16x8xf32> to vector<16x1xf32>
    %26 = vector.extract_strided_slice %19 {offsets = [0, 6], sizes = [16, 1], strides = [1, 1]} : vector<16x8xf32> to vector<16x1xf32>
    %c1_i32 = arith.constant 1 : i32
    %27 = tpu.dynamic_rotate %1 by %c1_i32 dim 1 : vector<8x256xf32>, i32 -> vector<8x256xf32>
    %28 = vector.broadcast %17 : vector<1x256xf32> to vector<8x256xf32>
    %29 = arith.mulf %27, %28 : vector<8x256xf32>
    %30 = tpu.concatenate %1, %29 in 0 : vector<8x256xf32>, vector<8x256xf32> -> vector<16x256xf32>
    %c0_13 = arith.constant 0 : index
    %c0_14 = arith.constant 0 : index
    %31 = vector.load %arg4[%c0_13, %c0_14] : memref<8x16xbf16, #tpu.memory_space<vmem>>, vector<8x16xbf16>
    %32 = arith.truncf %30 : vector<16x256xf32> to vector<16x256xbf16>
    %cst_15 = arith.constant dense<0.000000e+00> : vector<8x256xf32>
    %33 = tpu.matmul %31, %32, %cst_15 {dimension_numbers = #tpu.dot_dimension_numbers<[1], [0], [0], [1], [0, 0, 1, 1], [], []>} : vector<8x16xbf16>, vector<16x256xbf16>, vector<8x256xf32> -> vector<8x256xf32>
    %34 = vector.broadcast %20 : vector<8x1xf32> to vector<8x256xf32>
    %35 = arith.addf %33, %34 : vector<8x256xf32>
    %c255_i32 = arith.constant 255 : i32
    %36 = tpu.dynamic_rotate %1 by %c255_i32 dim 1 : vector<8x256xf32>, i32 -> vector<8x256xf32>
    %37 = vector.broadcast %18 : vector<1x256xf32> to vector<8x256xf32>
    %38 = arith.mulf %36, %37 : vector<8x256xf32>
    %39 = tpu.concatenate %1, %38 in 0 : vector<8x256xf32>, vector<8x256xf32> -> vector<16x256xf32>
    %c0_16 = arith.constant 0 : index
    %c0_17 = arith.constant 0 : index
    %40 = vector.load %arg5[%c0_16, %c0_17] : memref<8x16xbf16, #tpu.memory_space<vmem>>, vector<8x16xbf16>
    %41 = arith.truncf %39 : vector<16x256xf32> to vector<16x256xbf16>
    %cst_18 = arith.constant dense<0.000000e+00> : vector<8x256xf32>
    %42 = tpu.matmul %40, %41, %cst_18 {dimension_numbers = #tpu.dot_dimension_numbers<[1], [0], [0], [1], [0, 0, 1, 1], [], []>} : vector<8x16xbf16>, vector<16x256xbf16>, vector<8x256xf32> -> vector<8x256xf32>
    %43 = vector.broadcast %20 : vector<8x1xf32> to vector<8x256xf32>
    %44 = arith.addf %42, %43 : vector<8x256xf32>
    %45 = vector.extract_strided_slice %3 {offsets = [0, 0], sizes = [8, 256], strides = [1, 1]} : vector<8x512xf32> to vector<8x256xf32>
    %46 = tpu.concatenate %35, %45 in 0 : vector<8x256xf32>, vector<8x256xf32> -> vector<16x256xf32>
    %47 = vector.extract_strided_slice %3 {offsets = [0, 256], sizes = [8, 256], strides = [1, 1]} : vector<8x512xf32> to vector<8x256xf32>
    %48 = tpu.concatenate %44, %47 in 0 : vector<8x256xf32>, vector<8x256xf32> -> vector<16x256xf32>
    %c1_i32_19 = arith.constant 1 : i32
    %49 = tpu.dynamic_rotate %48 by %c1_i32_19 dim 1 : vector<16x256xf32>, i32 -> vector<16x256xf32>
    %50 = vector.broadcast %17 : vector<1x256xf32> to vector<16x256xf32>
    %51 = arith.mulf %49, %50 : vector<16x256xf32>
    %52 = tpu.concatenate %51, %46, %48 in 0 : vector<16x256xf32>, vector<16x256xf32>, vector<16x256xf32> -> vector<48x256xf32>
    %c0_20 = arith.constant 0 : index
    %c0_21 = arith.constant 0 : index
    %53 = vector.load %arg6[%c0_20, %c0_21] : memref<16x48xbf16, #tpu.memory_space<vmem>>, vector<16x48xbf16>
    %54 = arith.truncf %52 : vector<48x256xf32> to vector<48x256xbf16>
    %cst_22 = arith.constant dense<0.000000e+00> : vector<16x256xf32>
    %55 = tpu.matmul %53, %54, %cst_22 {dimension_numbers = #tpu.dot_dimension_numbers<[1], [0], [0], [1], [0, 0, 1, 1], [], []>} : vector<16x48xbf16>, vector<48x256xbf16>, vector<16x256xf32> -> vector<16x256xf32>
    %56 = vector.broadcast %21 : vector<16x1xf32> to vector<16x256xf32>
    %57 = arith.addf %55, %56 : vector<16x256xf32>
    %c255_i32_23 = arith.constant 255 : i32
    %58 = tpu.dynamic_rotate %46 by %c255_i32_23 dim 1 : vector<16x256xf32>, i32 -> vector<16x256xf32>
    %59 = vector.broadcast %18 : vector<1x256xf32> to vector<16x256xf32>
    %60 = arith.mulf %58, %59 : vector<16x256xf32>
    %61 = tpu.concatenate %46, %48, %60 in 0 : vector<16x256xf32>, vector<16x256xf32>, vector<16x256xf32> -> vector<48x256xf32>
    %c0_24 = arith.constant 0 : index
    %c0_25 = arith.constant 0 : index
    %62 = vector.load %arg6[%c0_24, %c0_25] : memref<16x48xbf16, #tpu.memory_space<vmem>>, vector<16x48xbf16>
    %63 = arith.truncf %61 : vector<48x256xf32> to vector<48x256xbf16>
    %cst_26 = arith.constant dense<0.000000e+00> : vector<16x256xf32>
    %64 = tpu.matmul %62, %63, %cst_26 {dimension_numbers = #tpu.dot_dimension_numbers<[1], [0], [0], [1], [0, 0, 1, 1], [], []>} : vector<16x48xbf16>, vector<48x256xbf16>, vector<16x256xf32> -> vector<16x256xf32>
    %65 = vector.broadcast %21 : vector<16x1xf32> to vector<16x256xf32>
    %66 = arith.addf %64, %65 : vector<16x256xf32>
    %67 = vector.extract_strided_slice %57 {offsets = [0, 0], sizes = [16, 128], strides = [1, 1]} : vector<16x256xf32> to vector<16x128xf32>
    %cst_27 = arith.constant dense<0.000000e+00> : vector<16xf32>
    %68 = vector.multi_reduction <add>, %67, %cst_27 [1] : vector<16x128xf32> to vector<16xf32>
    %69 = vector.shape_cast %68 : vector<16xf32> to vector<16x1xf32>
    %70 = vector.extract_strided_slice %57 {offsets = [0, 128], sizes = [16, 128], strides = [1, 1]} : vector<16x256xf32> to vector<16x128xf32>
    %cst_28 = arith.constant dense<0.000000e+00> : vector<16xf32>
    %71 = vector.multi_reduction <add>, %70, %cst_28 [1] : vector<16x128xf32> to vector<16xf32>
    %72 = vector.shape_cast %71 : vector<16xf32> to vector<16x1xf32>
    %73 = tpu.concatenate %69, %72 in 1 : vector<16x1xf32>, vector<16x1xf32> -> vector<16x2xf32>
    %74 = vector.extract_strided_slice %66 {offsets = [0, 0], sizes = [16, 128], strides = [1, 1]} : vector<16x256xf32> to vector<16x128xf32>
    %cst_29 = arith.constant dense<0.000000e+00> : vector<16xf32>
    %75 = vector.multi_reduction <add>, %74, %cst_29 [1] : vector<16x128xf32> to vector<16xf32>
    %76 = vector.shape_cast %75 : vector<16xf32> to vector<16x1xf32>
    %77 = vector.extract_strided_slice %66 {offsets = [0, 128], sizes = [16, 128], strides = [1, 1]} : vector<16x256xf32> to vector<16x128xf32>
    %cst_30 = arith.constant dense<0.000000e+00> : vector<16xf32>
    %78 = vector.multi_reduction <add>, %77, %cst_30 [1] : vector<16x128xf32> to vector<16xf32>
    %79 = vector.shape_cast %78 : vector<16xf32> to vector<16x1xf32>
    %80 = tpu.concatenate %76, %79 in 1 : vector<16x1xf32>, vector<16x1xf32> -> vector<16x2xf32>
    %81 = arith.addf %73, %80 : vector<16x2xf32>
    %c0_31 = arith.constant 0 : index
    %c0_32 = arith.constant 0 : index
    %82 = vector.load %arg9[%c0_31, %c0_32] : memref<16x16xf32, #tpu.memory_space<vmem>>, vector<16x16xf32>
    %cst_33 = arith.constant dense<0.000000e+00> : vector<16x2xf32>
    %83 = tpu.matmul %82, %81, %cst_33 {dimension_numbers = #tpu.dot_dimension_numbers<[1], [0], [0], [1], [0, 0, 1, 1], [], []>} : vector<16x16xf32>, vector<16x2xf32>, vector<16x2xf32> -> vector<16x2xf32>
    %84 = vector.extract_strided_slice %83 {offsets = [0, 0], sizes = [16, 1], strides = [1, 1]} : vector<16x2xf32> to vector<16x1xf32>
    %85 = vector.shape_cast %84 : vector<16x1xf32> to vector<16x1xf32>
    %86 = vector.broadcast %85 : vector<16x1xf32> to vector<16x128xf32>
    %87 = vector.extract_strided_slice %83 {offsets = [0, 1], sizes = [16, 1], strides = [1, 1]} : vector<16x2xf32> to vector<16x1xf32>
    %88 = vector.shape_cast %87 : vector<16x1xf32> to vector<16x1xf32>
    %89 = vector.broadcast %88 : vector<16x1xf32> to vector<16x128xf32>
    %90 = tpu.concatenate %86, %89 in 1 : vector<16x128xf32>, vector<16x128xf32> -> vector<16x256xf32>
    %91 = arith.subf %57, %90 : vector<16x256xf32>
    %92 = arith.subf %66, %90 : vector<16x256xf32>
    %93 = arith.mulf %91, %91 : vector<16x256xf32>
    %94 = vector.extract_strided_slice %93 {offsets = [0, 0], sizes = [16, 128], strides = [1, 1]} : vector<16x256xf32> to vector<16x128xf32>
    %cst_34 = arith.constant dense<0.000000e+00> : vector<16xf32>
    %95 = vector.multi_reduction <add>, %94, %cst_34 [1] : vector<16x128xf32> to vector<16xf32>
    %96 = vector.shape_cast %95 : vector<16xf32> to vector<16x1xf32>
    %97 = vector.extract_strided_slice %93 {offsets = [0, 128], sizes = [16, 128], strides = [1, 1]} : vector<16x256xf32> to vector<16x128xf32>
    %cst_35 = arith.constant dense<0.000000e+00> : vector<16xf32>
    %98 = vector.multi_reduction <add>, %97, %cst_35 [1] : vector<16x128xf32> to vector<16xf32>
    %99 = vector.shape_cast %98 : vector<16xf32> to vector<16x1xf32>
    %100 = tpu.concatenate %96, %99 in 1 : vector<16x1xf32>, vector<16x1xf32> -> vector<16x2xf32>
    %101 = arith.mulf %92, %92 : vector<16x256xf32>
    %102 = vector.extract_strided_slice %101 {offsets = [0, 0], sizes = [16, 128], strides = [1, 1]} : vector<16x256xf32> to vector<16x128xf32>
    %cst_36 = arith.constant dense<0.000000e+00> : vector<16xf32>
    %103 = vector.multi_reduction <add>, %102, %cst_36 [1] : vector<16x128xf32> to vector<16xf32>
    %104 = vector.shape_cast %103 : vector<16xf32> to vector<16x1xf32>
    %105 = vector.extract_strided_slice %101 {offsets = [0, 128], sizes = [16, 128], strides = [1, 1]} : vector<16x256xf32> to vector<16x128xf32>
    %cst_37 = arith.constant dense<0.000000e+00> : vector<16xf32>
    %106 = vector.multi_reduction <add>, %105, %cst_37 [1] : vector<16x128xf32> to vector<16xf32>
    %107 = vector.shape_cast %106 : vector<16xf32> to vector<16x1xf32>
    %108 = tpu.concatenate %104, %107 in 1 : vector<16x1xf32>, vector<16x1xf32> -> vector<16x2xf32>
    %109 = arith.addf %100, %108 : vector<16x2xf32>
    %c0_38 = arith.constant 0 : index
    %c0_39 = arith.constant 0 : index
    %110 = vector.load %arg9[%c0_38, %c0_39] : memref<16x16xf32, #tpu.memory_space<vmem>>, vector<16x16xf32>
    %cst_40 = arith.constant dense<0.000000e+00> : vector<16x2xf32>
    %111 = tpu.matmul %110, %109, %cst_40 {dimension_numbers = #tpu.dot_dimension_numbers<[1], [0], [0], [1], [0, 0, 1, 1], [], []>} : vector<16x16xf32>, vector<16x2xf32>, vector<16x2xf32> -> vector<16x2xf32>
    %cst_41 = arith.constant 9.99999974E-6 : f32
    %112 = vector.broadcast %cst_41 : f32 to vector<16x2xf32>
    %113 = arith.addf %111, %112 : vector<16x2xf32>
    %114 = math.rsqrt %113 : vector<16x2xf32>
    %115 = vector.broadcast %22 : vector<16x1xf32> to vector<16x2xf32>
    %116 = arith.mulf %115, %114 : vector<16x2xf32>
    %117 = vector.extract_strided_slice %116 {offsets = [0, 0], sizes = [16, 1], strides = [1, 1]} : vector<16x2xf32> to vector<16x1xf32>
    %118 = vector.shape_cast %117 : vector<16x1xf32> to vector<16x1xf32>
    %119 = vector.broadcast %118 : vector<16x1xf32> to vector<16x128xf32>
    %120 = vector.extract_strided_slice %116 {offsets = [0, 1], sizes = [16, 1], strides = [1, 1]} : vector<16x2xf32> to vector<16x1xf32>
    %121 = vector.shape_cast %120 : vector<16x1xf32> to vector<16x1xf32>
    %122 = vector.broadcast %121 : vector<16x1xf32> to vector<16x128xf32>
    %123 = tpu.concatenate %119, %122 in 1 : vector<16x128xf32>, vector<16x128xf32> -> vector<16x256xf32>
    %124 = arith.mulf %91, %123 : vector<16x256xf32>
    %125 = vector.broadcast %23 : vector<16x1xf32> to vector<16x256xf32>
    %126 = arith.addf %124, %125 : vector<16x256xf32>
    %127 = arith.mulf %92, %123 : vector<16x256xf32>
    %128 = vector.broadcast %23 : vector<16x1xf32> to vector<16x256xf32>
    %129 = arith.addf %127, %128 : vector<16x256xf32>
    %130 = arith.negf %126 : vector<16x256xf32>
    %131 = math.exp %130 : vector<16x256xf32>
    %cst_42 = arith.constant 1.000000e+00 : f32
    %132 = vector.broadcast %cst_42 : f32 to vector<16x256xf32>
    %133 = arith.addf %132, %131 : vector<16x256xf32>
    %134 = arith.divf %132, %133 : vector<16x256xf32>
    %135 = arith.mulf %126, %134 : vector<16x256xf32>
    %136 = arith.negf %129 : vector<16x256xf32>
    %137 = math.exp %136 : vector<16x256xf32>
    %cst_43 = arith.constant 1.000000e+00 : f32
    %138 = vector.broadcast %cst_43 : f32 to vector<16x256xf32>
    %139 = arith.addf %138, %137 : vector<16x256xf32>
    %140 = arith.divf %138, %139 : vector<16x256xf32>
    %141 = arith.mulf %129, %140 : vector<16x256xf32>
    %c1_i32_44 = arith.constant 1 : i32
    %142 = tpu.dynamic_rotate %141 by %c1_i32_44 dim 1 : vector<16x256xf32>, i32 -> vector<16x256xf32>
    %143 = vector.broadcast %17 : vector<1x256xf32> to vector<16x256xf32>
    %144 = arith.mulf %142, %143 : vector<16x256xf32>
    %145 = tpu.concatenate %144, %135, %141 in 0 : vector<16x256xf32>, vector<16x256xf32>, vector<16x256xf32> -> vector<48x256xf32>
    %c0_45 = arith.constant 0 : index
    %c0_46 = arith.constant 0 : index
    %146 = vector.load %arg7[%c0_45, %c0_46] : memref<16x48xbf16, #tpu.memory_space<vmem>>, vector<16x48xbf16>
    %147 = arith.truncf %145 : vector<48x256xf32> to vector<48x256xbf16>
    %cst_47 = arith.constant dense<0.000000e+00> : vector<16x256xf32>
    %148 = tpu.matmul %146, %147, %cst_47 {dimension_numbers = #tpu.dot_dimension_numbers<[1], [0], [0], [1], [0, 0, 1, 1], [], []>} : vector<16x48xbf16>, vector<48x256xbf16>, vector<16x256xf32> -> vector<16x256xf32>
    %149 = vector.broadcast %24 : vector<16x1xf32> to vector<16x256xf32>
    %150 = arith.addf %148, %149 : vector<16x256xf32>
    %c255_i32_48 = arith.constant 255 : i32
    %151 = tpu.dynamic_rotate %135 by %c255_i32_48 dim 1 : vector<16x256xf32>, i32 -> vector<16x256xf32>
    %152 = vector.broadcast %18 : vector<1x256xf32> to vector<16x256xf32>
    %153 = arith.mulf %151, %152 : vector<16x256xf32>
    %154 = tpu.concatenate %135, %141, %153 in 0 : vector<16x256xf32>, vector<16x256xf32>, vector<16x256xf32> -> vector<48x256xf32>
    %c0_49 = arith.constant 0 : index
    %c0_50 = arith.constant 0 : index
    %155 = vector.load %arg7[%c0_49, %c0_50] : memref<16x48xbf16, #tpu.memory_space<vmem>>, vector<16x48xbf16>
    %156 = arith.truncf %154 : vector<48x256xf32> to vector<48x256xbf16>
    %cst_51 = arith.constant dense<0.000000e+00> : vector<16x256xf32>
    %157 = tpu.matmul %155, %156, %cst_51 {dimension_numbers = #tpu.dot_dimension_numbers<[1], [0], [0], [1], [0, 0, 1, 1], [], []>} : vector<16x48xbf16>, vector<48x256xbf16>, vector<16x256xf32> -> vector<16x256xf32>
    %158 = vector.broadcast %24 : vector<16x1xf32> to vector<16x256xf32>
    %159 = arith.addf %157, %158 : vector<16x256xf32>
    %160 = vector.extract_strided_slice %150 {offsets = [0, 0], sizes = [16, 128], strides = [1, 1]} : vector<16x256xf32> to vector<16x128xf32>
    %cst_52 = arith.constant dense<0.000000e+00> : vector<16xf32>
    %161 = vector.multi_reduction <add>, %160, %cst_52 [1] : vector<16x128xf32> to vector<16xf32>
    %162 = vector.shape_cast %161 : vector<16xf32> to vector<16x1xf32>
    %163 = vector.extract_strided_slice %150 {offsets = [0, 128], sizes = [16, 128], strides = [1, 1]} : vector<16x256xf32> to vector<16x128xf32>
    %cst_53 = arith.constant dense<0.000000e+00> : vector<16xf32>
    %164 = vector.multi_reduction <add>, %163, %cst_53 [1] : vector<16x128xf32> to vector<16xf32>
    %165 = vector.shape_cast %164 : vector<16xf32> to vector<16x1xf32>
    %166 = tpu.concatenate %162, %165 in 1 : vector<16x1xf32>, vector<16x1xf32> -> vector<16x2xf32>
    %167 = vector.extract_strided_slice %159 {offsets = [0, 0], sizes = [16, 128], strides = [1, 1]} : vector<16x256xf32> to vector<16x128xf32>
    %cst_54 = arith.constant dense<0.000000e+00> : vector<16xf32>
    %168 = vector.multi_reduction <add>, %167, %cst_54 [1] : vector<16x128xf32> to vector<16xf32>
    %169 = vector.shape_cast %168 : vector<16xf32> to vector<16x1xf32>
    %170 = vector.extract_strided_slice %159 {offsets = [0, 128], sizes = [16, 128], strides = [1, 1]} : vector<16x256xf32> to vector<16x128xf32>
    %cst_55 = arith.constant dense<0.000000e+00> : vector<16xf32>
    %171 = vector.multi_reduction <add>, %170, %cst_55 [1] : vector<16x128xf32> to vector<16xf32>
    %172 = vector.shape_cast %171 : vector<16xf32> to vector<16x1xf32>
    %173 = tpu.concatenate %169, %172 in 1 : vector<16x1xf32>, vector<16x1xf32> -> vector<16x2xf32>
    %174 = arith.addf %166, %173 : vector<16x2xf32>
    %c0_56 = arith.constant 0 : index
    %c0_57 = arith.constant 0 : index
    %175 = vector.load %arg9[%c0_56, %c0_57] : memref<16x16xf32, #tpu.memory_space<vmem>>, vector<16x16xf32>
    %cst_58 = arith.constant dense<0.000000e+00> : vector<16x2xf32>
    %176 = tpu.matmul %175, %174, %cst_58 {dimension_numbers = #tpu.dot_dimension_numbers<[1], [0], [0], [1], [0, 0, 1, 1], [], []>} : vector<16x16xf32>, vector<16x2xf32>, vector<16x2xf32> -> vector<16x2xf32>
    %177 = vector.extract_strided_slice %176 {offsets = [0, 0], sizes = [16, 1], strides = [1, 1]} : vector<16x2xf32> to vector<16x1xf32>
    %178 = vector.shape_cast %177 : vector<16x1xf32> to vector<16x1xf32>
    %179 = vector.broadcast %178 : vector<16x1xf32> to vector<16x128xf32>
    %180 = vector.extract_strided_slice %176 {offsets = [0, 1], sizes = [16, 1], strides = [1, 1]} : vector<16x2xf32> to vector<16x1xf32>
    %181 = vector.shape_cast %180 : vector<16x1xf32> to vector<16x1xf32>
    %182 = vector.broadcast %181 : vector<16x1xf32> to vector<16x128xf32>
    %183 = tpu.concatenate %179, %182 in 1 : vector<16x128xf32>, vector<16x128xf32> -> vector<16x256xf32>
    %184 = arith.subf %150, %183 : vector<16x256xf32>
    %185 = arith.subf %159, %183 : vector<16x256xf32>
    %186 = arith.mulf %184, %184 : vector<16x256xf32>
    %187 = vector.extract_strided_slice %186 {offsets = [0, 0], sizes = [16, 128], strides = [1, 1]} : vector<16x256xf32> to vector<16x128xf32>
    %cst_59 = arith.constant dense<0.000000e+00> : vector<16xf32>
    %188 = vector.multi_reduction <add>, %187, %cst_59 [1] : vector<16x128xf32> to vector<16xf32>
    %189 = vector.shape_cast %188 : vector<16xf32> to vector<16x1xf32>
    %190 = vector.extract_strided_slice %186 {offsets = [0, 128], sizes = [16, 128], strides = [1, 1]} : vector<16x256xf32> to vector<16x128xf32>
    %cst_60 = arith.constant dense<0.000000e+00> : vector<16xf32>
    %191 = vector.multi_reduction <add>, %190, %cst_60 [1] : vector<16x128xf32> to vector<16xf32>
    %192 = vector.shape_cast %191 : vector<16xf32> to vector<16x1xf32>
    %193 = tpu.concatenate %189, %192 in 1 : vector<16x1xf32>, vector<16x1xf32> -> vector<16x2xf32>
    %194 = arith.mulf %185, %185 : vector<16x256xf32>
    %195 = vector.extract_strided_slice %194 {offsets = [0, 0], sizes = [16, 128], strides = [1, 1]} : vector<16x256xf32> to vector<16x128xf32>
    %cst_61 = arith.constant dense<0.000000e+00> : vector<16xf32>
    %196 = vector.multi_reduction <add>, %195, %cst_61 [1] : vector<16x128xf32> to vector<16xf32>
    %197 = vector.shape_cast %196 : vector<16xf32> to vector<16x1xf32>
    %198 = vector.extract_strided_slice %194 {offsets = [0, 128], sizes = [16, 128], strides = [1, 1]} : vector<16x256xf32> to vector<16x128xf32>
    %cst_62 = arith.constant dense<0.000000e+00> : vector<16xf32>
    %199 = vector.multi_reduction <add>, %198, %cst_62 [1] : vector<16x128xf32> to vector<16xf32>
    %200 = vector.shape_cast %199 : vector<16xf32> to vector<16x1xf32>
    %201 = tpu.concatenate %197, %200 in 1 : vector<16x1xf32>, vector<16x1xf32> -> vector<16x2xf32>
    %202 = arith.addf %193, %201 : vector<16x2xf32>
    %c0_63 = arith.constant 0 : index
    %c0_64 = arith.constant 0 : index
    %203 = vector.load %arg9[%c0_63, %c0_64] : memref<16x16xf32, #tpu.memory_space<vmem>>, vector<16x16xf32>
    %cst_65 = arith.constant dense<0.000000e+00> : vector<16x2xf32>
    %204 = tpu.matmul %203, %202, %cst_65 {dimension_numbers = #tpu.dot_dimension_numbers<[1], [0], [0], [1], [0, 0, 1, 1], [], []>} : vector<16x16xf32>, vector<16x2xf32>, vector<16x2xf32> -> vector<16x2xf32>
    %cst_66 = arith.constant 9.99999974E-6 : f32
    %205 = vector.broadcast %cst_66 : f32 to vector<16x2xf32>
    %206 = arith.addf %204, %205 : vector<16x2xf32>
    %207 = math.rsqrt %206 : vector<16x2xf32>
    %208 = vector.broadcast %25 : vector<16x1xf32> to vector<16x2xf32>
    %209 = arith.mulf %208, %207 : vector<16x2xf32>
    %210 = vector.extract_strided_slice %209 {offsets = [0, 0], sizes = [16, 1], strides = [1, 1]} : vector<16x2xf32> to vector<16x1xf32>
    %211 = vector.shape_cast %210 : vector<16x1xf32> to vector<16x1xf32>
    %212 = vector.broadcast %211 : vector<16x1xf32> to vector<16x128xf32>
    %213 = vector.extract_strided_slice %209 {offsets = [0, 1], sizes = [16, 1], strides = [1, 1]} : vector<16x2xf32> to vector<16x1xf32>
    %214 = vector.shape_cast %213 : vector<16x1xf32> to vector<16x1xf32>
    %215 = vector.broadcast %214 : vector<16x1xf32> to vector<16x128xf32>
    %216 = tpu.concatenate %212, %215 in 1 : vector<16x128xf32>, vector<16x128xf32> -> vector<16x256xf32>
    %217 = arith.mulf %184, %216 : vector<16x256xf32>
    %218 = vector.broadcast %26 : vector<16x1xf32> to vector<16x256xf32>
    %219 = arith.addf %217, %218 : vector<16x256xf32>
    %220 = arith.mulf %185, %216 : vector<16x256xf32>
    %221 = vector.broadcast %26 : vector<16x1xf32> to vector<16x256xf32>
    %222 = arith.addf %220, %221 : vector<16x256xf32>
    %223 = arith.negf %219 : vector<16x256xf32>
    %224 = math.exp %223 : vector<16x256xf32>
    %cst_67 = arith.constant 1.000000e+00 : f32
    %225 = vector.broadcast %cst_67 : f32 to vector<16x256xf32>
    %226 = arith.addf %225, %224 : vector<16x256xf32>
    %227 = arith.divf %225, %226 : vector<16x256xf32>
    %228 = arith.mulf %219, %227 : vector<16x256xf32>
    %229 = arith.negf %222 : vector<16x256xf32>
    %230 = math.exp %229 : vector<16x256xf32>
    %cst_68 = arith.constant 1.000000e+00 : f32
    %231 = vector.broadcast %cst_68 : f32 to vector<16x256xf32>
    %232 = arith.addf %231, %230 : vector<16x256xf32>
    %233 = arith.divf %231, %232 : vector<16x256xf32>
    %234 = arith.mulf %222, %233 : vector<16x256xf32>
    %235 = vector.extract_strided_slice %5 {offsets = [0, 0], sizes = [16, 1], strides = [1, 1]} : vector<16x2xf32> to vector<16x1xf32>
    %236 = vector.shape_cast %235 : vector<16x1xf32> to vector<16x1xf32>
    %237 = vector.broadcast %236 : vector<16x1xf32> to vector<16x128xf32>
    %238 = vector.extract_strided_slice %5 {offsets = [0, 1], sizes = [16, 1], strides = [1, 1]} : vector<16x2xf32> to vector<16x1xf32>
    %239 = vector.shape_cast %238 : vector<16x1xf32> to vector<16x1xf32>
    %240 = vector.broadcast %239 : vector<16x1xf32> to vector<16x128xf32>
    %241 = tpu.concatenate %237, %240 in 1 : vector<16x128xf32>, vector<16x128xf32> -> vector<16x256xf32>
    %242 = arith.addf %228, %241 : vector<16x256xf32>
    %c0_69 = arith.constant 0 : index
    %c0_70 = arith.constant 0 : index
    %c0_71 = arith.constant 0 : index
    %243 = vector.load %arg10[%c0_69, %c0_70, %c0_71] : memref<1x16x512xf32, #tpu.memory_space<vmem>>, vector<1x16x256xf32>
    %244 = vector.shape_cast %243 : vector<1x16x256xf32> to vector<16x256xf32>
    %245 = vector.shape_cast %242 : vector<16x256xf32> to vector<1x16x256xf32>
    tpu.vector_store %arg10[%c0_69, %c0_70, %c0_71], %245 {strides = array<i32>} : memref<1x16x512xf32, #tpu.memory_space<vmem>>, vector<1x16x256xf32>,
    %246 = arith.addf %234, %241 : vector<16x256xf32>
    %c0_72 = arith.constant 0 : index
    %c0_73 = arith.constant 0 : index
    %c256 = arith.constant 256 : index
    %247 = vector.load %arg10[%c0_72, %c0_73, %c256] : memref<1x16x512xf32, #tpu.memory_space<vmem>>, vector<1x16x256xf32>
    %248 = vector.shape_cast %247 : vector<1x16x256xf32> to vector<16x256xf32>
    %249 = vector.shape_cast %246 : vector<16x256xf32> to vector<1x16x256xf32>
    tpu.vector_store %arg10[%c0_72, %c0_73, %c256], %249 {strides = array<i32>} : memref<1x16x512xf32, #tpu.memory_space<vmem>>, vector<1x16x256xf32>,
    return
  }
  func.func @transform_0(%arg0: i32) -> (i32, i32, i32) {
    %c0_i32 = arith.constant 0 : i32
    %c0_i32_0 = arith.constant 0 : i32
    %c0_i32_1 = arith.constant 0 : i32
    return %arg0, %c0_i32, %c0_i32_0 : i32, i32, i32
  }
  func.func @transform_1(%arg0: i32) -> (i32, i32, i32) {
    %c0_i32 = arith.constant 0 : i32
    %c0_i32_0 = arith.constant 0 : i32
    %c0_i32_1 = arith.constant 0 : i32
    return %arg0, %c0_i32, %c0_i32_0 : i32, i32, i32
  }
  func.func @transform_2(%arg0: i32) -> (i32, i32, i32) {
    %c0_i32 = arith.constant 0 : i32
    %c0_i32_0 = arith.constant 0 : i32
    %c0_i32_1 = arith.constant 0 : i32
    return %arg0, %c0_i32, %c0_i32_0 : i32, i32, i32
  }
  func.func @transform_3(%arg0: i32) -> (i32, i32) {
    %c0_i32 = arith.constant 0 : i32
    %c0_i32_0 = arith.constant 0 : i32
    %c0_i32_1 = arith.constant 0 : i32
    return %c0_i32, %c0_i32_0 : i32, i32
  }
  func.func @transform_4(%arg0: i32) -> (i32, i32) {
    %c0_i32 = arith.constant 0 : i32
    %c0_i32_0 = arith.constant 0 : i32
    %c0_i32_1 = arith.constant 0 : i32
    return %c0_i32, %c0_i32_0 : i32, i32
  }
  func.func @transform_5(%arg0: i32) -> (i32, i32) {
    %c0_i32 = arith.constant 0 : i32
    %c0_i32_0 = arith.constant 0 : i32
    %c0_i32_1 = arith.constant 0 : i32
    return %c0_i32, %c0_i32_0 : i32, i32
  }
  func.func @transform_6(%arg0: i32) -> (i32, i32) {
    %c0_i32 = arith.constant 0 : i32
    %c0_i32_0 = arith.constant 0 : i32
    %c0_i32_1 = arith.constant 0 : i32
    return %c0_i32, %c0_i32_0 : i32, i32
  }
  func.func @transform_7(%arg0: i32) -> (i32, i32) {
    %c0_i32 = arith.constant 0 : i32
    %c0_i32_0 = arith.constant 0 : i32
    %c0_i32_1 = arith.constant 0 : i32
    return %c0_i32, %c0_i32_0 : i32, i32
  }
  func.func @transform_8(%arg0: i32) -> (i32, i32) {
    %c0_i32 = arith.constant 0 : i32
    %c0_i32_0 = arith.constant 0 : i32
    %c0_i32_1 = arith.constant 0 : i32
    return %c0_i32, %c0_i32_0 : i32, i32
  }
  func.func @transform_9(%arg0: i32) -> (i32, i32, i32) {
    %c0_i32 = arith.constant 0 : i32
    %c0_i32_0 = arith.constant 0 : i32
    %c0_i32_1 = arith.constant 0 : i32
    return %arg0, %c0_i32, %c0_i32_0 : i32, i32, i32
  }
}

</mosaic_0001>

<llo_original>
// kernel: tpu_custom_call.1
$region0: #{tpu_custom_call.1}
  #allocation0 [shape = 'u32[]', space=smem, size = 0x4, offset = 0x4, fixed_abs, tag = 'smem constant byte address 0x4 - core index']
  #allocation1 [shape = 'u32[144,128]{1,0:T(1,128)}', space=vmem, size = 0x12000, scoped, tag = 'internal scratch']
  %s0 = inlined_call_operand.vmem [shape: f32[2,8,256], index: 0, kind: input, shape index: {}]
  %s1 = inlined_call_operand.hbm [shape: f32[2,8,512], index: 1, kind: input, shape index: {}]
  %s2 = inlined_call_operand.vmem [shape: f32[2,16,2], index: 2, kind: input, shape index: {}]
  %s3 = inlined_call_operand.hbm [shape: bf16[8,16], index: 3, kind: input, shape index: {}]
  %s4 = inlined_call_operand.hbm [shape: bf16[8,16], index: 4, kind: input, shape index: {}]
  %s5 = inlined_call_operand.vmem [shape: bf16[16,48], index: 5, kind: input, shape index: {}]
  %s6 = inlined_call_operand.vmem [shape: bf16[16,48], index: 6, kind: input, shape index: {}]
  %s7 = inlined_call_operand.vmem [shape: f32[16,8], index: 7, kind: input, shape index: {}]
  %s8 = inlined_call_operand.vmem [shape: f32[16,16], index: 8, kind: input, shape index: {}]
  %s9 = inlined_call_operand.hbm [shape: f32[2,16,512], index: 9, kind: output, shape index: {}]
  %s10 = sld [smem:[#allocation0]]
  $region81: #{tpu_custom_call.1} parent=0
    _
  %s12 = ssub.s32 1, %s10
  %s13 = scalar_select 0, %s12, %s10
  $region1: #{tpu_custom_call.1} parent=0
    #allocation2 [shape = 'u8[32768]{0}', space=vmem, size = 0x8000, scoped, tag = 'input window, operand 1']
    #allocation3 [shape = 's32[2]{0}', space=sflag, size = 0x8, scoped, tag = 'scoped memory for tpu_custom_call.1']
    #allocation4 [shape = 's32[2]{0}', space=sflag, size = 0x8, scoped, tag = 'scoped memory for tpu_custom_call.1']
    #allocation5 [shape = 'u8[2048]{0}', space=vmem, size = 0x800, scoped, tag = 'input window, operand 3, single buffered']
    #allocation6 [shape = 's32[1]{0}', space=sflag, size = 0x4, scoped, tag = 'scoped memory for tpu_custom_call.1']
    #allocation7 [shape = 'u8[2048]{0}', space=vmem, size = 0x800, scoped, tag = 'input window, operand 4, single buffered']
    #allocation8 [shape = 'u8[65536]{0}', space=vmem, size = 0x10000, scoped, tag = 'output window, operand 0']
    %14 = vsyncpa [#allocation3], 0
    %s15 = scalar_lea.sflag [#allocation3], 1
    %16 = vsyncpa %s15, 0
    %17 = vsyncpa [#allocation6], 0
    %18 = vsyncpa [#allocation4], 0
    %s19 = scalar_lea.sflag [#allocation4], 1
    %20 = vsyncpa %s19, 0
    loop: start=0, step=1, limit=4
    $region2: #{tpu_custom_call.1} parent=1 // loop_pre_header
      _
    $region3: #{tpu_custom_call.1} parent=1 // loop_header
      %s22 = sphi 0, %s26
      %p23 = scmp.ge.s32.totalorder %s22, 4
      %s32 = sphi 0, %s34
      %s35 = sphi 0, %s32
      %s36 = sphi 0, %s35
      %s52 = sphi 0, %s36
      %s58 = sphi 0, %s60
      %s61 = sphi 0, %s58
      %s62 = sphi 0, %s61
      %s78 = sphi 0, %s62
      %s84 = sphi 0, %s86
      %s87 = sphi 0, %s84
      %s88 = sphi 0, %s87
      %s104 = sphi 0, %s88
      %s108 = sphi 0, %s108
      %s110 = sphi 0, %s108
      %s111 = sphi 0, %s110
      %s125 = sphi 0, %s111
      %s129 = sphi 0, %s129
      %s131 = sphi 0, %s129
      %s132 = sphi 0, %s131
      %s146 = sphi 0, %s132
      %s150 = sphi 0, %s150
      %s152 = sphi 0, %s150
      %s153 = sphi 0, %s152
      %s167 = sphi 0, %s153
      %s171 = sphi 0, %s171
      %s173 = sphi 0, %s171
      %s174 = sphi 0, %s173
      %s188 = sphi 0, %s174
      %s192 = sphi 0, %s192
      %s194 = sphi 0, %s192
      %s195 = sphi 0, %s194
      %s209 = sphi 0, %s195
      %s213 = sphi 0, %s213
      %s215 = sphi 0, %s213
      %s216 = sphi 0, %s215
      %s230 = sphi 0, %s216
      %s236 = sphi 0, %s238
      %s239 = sphi 0, %s236
      %s240 = sphi 0, %s239
      %s256 = sphi 0, %s240
    $region4: #{tpu_custom_call.1} parent=1 // loop_header_branch
      %25 = sbr.rel (%p23) target = $region8
    $region5: #{tpu_custom_call.1} parent=1 // loop_body
      %s27 = ssub.s32 %s22, 1
      %s28 = ssub.s32 %s22, 2
      %s29 = sadd.s32 %s22, 1
      %s30 = ssub.s32 %s22, %s29
      %p31 = scmp.eq.s32.totalorder %s30, 0
      %s33 = sadd.s32 %s32, 1
      %s34 = scalar_select %p31, %s32, %s33
      %p37 = pneg %p31
      %p38 = scmp.eq.s32.totalorder %s22, 1
      %p39 = por %p37, %p38
      %p40 = scmp.ne.s32.totalorder %s32, %s35
      %p41 = scmp.eq.s32.totalorder %s22, 0
      %p42 = por %p40, %p41
      %p43 = scmp.ne.s32.totalorder %s32, %s35
      %p44 = scmp.eq.s32.totalorder %s27, 1
      %p45 = por %p43, %p44
      %p46 = scmp.ne.s32.totalorder %s35, %s36
      %p47 = scmp.eq.s32.totalorder %s27, 0
      %p48 = por %p46, %p47
      %p49 = scmp.ne.s32.totalorder %s35, %s36
      %p50 = scmp.eq.s32.totalorder %s28, 1
      %p51 = por %p49, %p50
      %p53 = scmp.ne.s32.totalorder %s36, %s52
      %p54 = scmp.eq.s32.totalorder %s28, 0
      %p55 = por %p53, %p54
      %s56 = ssub.s32 %s22, %s29
      %p57 = scmp.eq.s32.totalorder %s56, 0
      %s59 = sadd.s32 %s58, 1
      %s60 = scalar_select %p57, %s58, %s59
      %p63 = pneg %p57
      %p64 = scmp.eq.s32.totalorder %s22, 1
      %p65 = por %p63, %p64
      %p66 = scmp.ne.s32.totalorder %s58, %s61
      %p67 = scmp.eq.s32.totalorder %s22, 0
      %p68 = por %p66, %p67
      %p69 = scmp.ne.s32.totalorder %s58, %s61
      %p70 = scmp.eq.s32.totalorder %s27, 1
      %p71 = por %p69, %p70
      %p72 = scmp.ne.s32.totalorder %s61, %s62
      %p73 = scmp.eq.s32.totalorder %s27, 0
      %p74 = por %p72, %p73
      %p75 = scmp.ne.s32.totalorder %s61, %s62
      %p76 = scmp.eq.s32.totalorder %s28, 1
      %p77 = por %p75, %p76
      %p79 = scmp.ne.s32.totalorder %s62, %s78
      %p80 = scmp.eq.s32.totalorder %s28, 0
      %p81 = por %p79, %p80
      %s82 = ssub.s32 %s22, %s29
      %p83 = scmp.eq.s32.totalorder %s82, 0
      %s85 = sadd.s32 %s84, 1
      %s86 = scalar_select %p83, %s84, %s85
      %p89 = pneg %p83
      %p90 = scmp.eq.s32.totalorder %s22, 1
      %p91 = por %p89, %p90
      %p92 = scmp.ne.s32.totalorder %s84, %s87
      %p93 = scmp.eq.s32.totalorder %s22, 0
      %p94 = por %p92, %p93
      %p95 = scmp.ne.s32.totalorder %s84, %s87
      %p96 = scmp.eq.s32.totalorder %s27, 1
      %p97 = por %p95, %p96
      %p98 = scmp.ne.s32.totalorder %s87, %s88
      %p99 = scmp.eq.s32.totalorder %s27, 0
      %p100 = por %p98, %p99
      %p101 = scmp.ne.s32.totalorder %s87, %s88
      %p102 = scmp.eq.s32.totalorder %s28, 1
      %p103 = por %p101, %p102
      %p105 = scmp.ne.s32.totalorder %s88, %s104
      %p106 = scmp.eq.s32.totalorder %s28, 0
      %p107 = por %p105, %p106
      %s109 = sadd.s32 %s108, 1
      %p112 = scmp.eq.s32.totalorder %s22, 1
      %p113 = scmp.ne.s32.totalorder %s108, %s110
      %p114 = scmp.eq.s32.totalorder %s22, 0
      %p115 = por %p113, %p114
      %p116 = scmp.ne.s32.totalorder %s108, %s110
      %p117 = scmp.eq.s32.totalorder %s27, 1
      %p118 = por %p116, %p117
      %p119 = scmp.ne.s32.totalorder %s110, %s111
      %p120 = scmp.eq.s32.totalorder %s27, 0
      %p121 = por %p119, %p120
      %p122 = scmp.ne.s32.totalorder %s110, %s111
      %p123 = scmp.eq.s32.totalorder %s28, 1
      %p124 = por %p122, %p123
      %p126 = scmp.ne.s32.totalorder %s111, %s125
      %p127 = scmp.eq.s32.totalorder %s28, 0
      %p128 = por %p126, %p127
      %s130 = sadd.s32 %s129, 1
      %p133 = scmp.eq.s32.totalorder %s22, 1
      %p134 = scmp.ne.s32.totalorder %s129, %s131
      %p135 = scmp.eq.s32.totalorder %s22, 0
      %p136 = por %p134, %p135
      %p137 = scmp.ne.s32.totalorder %s129, %s131
      %p138 = scmp.eq.s32.totalorder %s27, 1
      %p139 = por %p137, %p138
      %p140 = scmp.ne.s32.totalorder %s131, %s132
      %p141 = scmp.eq.s32.totalorder %s27, 0
      %p142 = por %p140, %p141
      %p143 = scmp.ne.s32.totalorder %s131, %s132
      %p144 = scmp.eq.s32.totalorder %s28, 1
      %p145 = por %p143, %p144
      %p147 = scmp.ne.s32.totalorder %s132, %s146
      %p148 = scmp.eq.s32.totalorder %s28, 0
      %p149 = por %p147, %p148
      %s151 = sadd.s32 %s150, 1
      %p154 = scmp.eq.s32.totalorder %s22, 1
      %p155 = scmp.ne.s32.totalorder %s150, %s152
      %p156 = scmp.eq.s32.totalorder %s22, 0
      %p157 = por %p155, %p156
      %p158 = scmp.ne.s32.totalorder %s150, %s152
      %p159 = scmp.eq.s32.totalorder %s27, 1
      %p160 = por %p158, %p159
      %p161 = scmp.ne.s32.totalorder %s152, %s153
      %p162 = scmp.eq.s32.totalorder %s27, 0
      %p163 = por %p161, %p162
      %p164 = scmp.ne.s32.totalorder %s152, %s153
      %p165 = scmp.eq.s32.totalorder %s28, 1
      %p166 = por %p164, %p165
      %p168 = scmp.ne.s32.totalorder %s153, %s167
      %p169 = scmp.eq.s32.totalorder %s28, 0
      %p170 = por %p168, %p169
      %s172 = sadd.s32 %s171, 1
      %p175 = scmp.eq.s32.totalorder %s22, 1
      %p176 = scmp.ne.s32.totalorder %s171, %s173
      %p177 = scmp.eq.s32.totalorder %s22, 0
      %p178 = por %p176, %p177
      %p179 = scmp.ne.s32.totalorder %s171, %s173
      %p180 = scmp.eq.s32.totalorder %s27, 1
      %p181 = por %p179, %p180
      %p182 = scmp.ne.s32.totalorder %s173, %s174
      %p183 = scmp.eq.s32.totalorder %s27, 0
      %p184 = por %p182, %p183
      %p185 = scmp.ne.s32.totalorder %s173, %s174
      %p186 = scmp.eq.s32.totalorder %s28, 1
      %p187 = por %p185, %p186
      %p189 = scmp.ne.s32.totalorder %s174, %s188
      %p190 = scmp.eq.s32.totalorder %s28, 0
      %p191 = por %p189, %p190
      %s193 = sadd.s32 %s192, 1
      %p196 = scmp.eq.s32.totalorder %s22, 1
      %p197 = scmp.ne.s32.totalorder %s192, %s194
      %p198 = scmp.eq.s32.totalorder %s22, 0
      %p199 = por %p197, %p198
      %p200 = scmp.ne.s32.totalorder %s192, %s194
      %p201 = scmp.eq.s32.totalorder %s27, 1
      %p202 = por %p200, %p201
      %p203 = scmp.ne.s32.totalorder %s194, %s195
      %p204 = scmp.eq.s32.totalorder %s27, 0
      %p205 = por %p203, %p204
      %p206 = scmp.ne.s32.totalorder %s194, %s195
      %p207 = scmp.eq.s32.totalorder %s28, 1
      %p208 = por %p206, %p207
      %p210 = scmp.ne.s32.totalorder %s195, %s209
      %p211 = scmp.eq.s32.totalorder %s28, 0
      %p212 = por %p210, %p211
      %s214 = sadd.s32 %s213, 1
      %p217 = scmp.eq.s32.totalorder %s22, 1
      %p218 = scmp.ne.s32.totalorder %s213, %s215
      %p219 = scmp.eq.s32.totalorder %s22, 0
      %p220 = por %p218, %p219
      %p221 = scmp.ne.s32.totalorder %s213, %s215
      %p222 = scmp.eq.s32.totalorder %s27, 1
      %p223 = por %p221, %p222
      %p224 = scmp.ne.s32.totalorder %s215, %s216
      %p225 = scmp.eq.s32.totalorder %s27, 0
      %p226 = por %p224, %p225
      %p227 = scmp.ne.s32.totalorder %s215, %s216
      %p228 = scmp.eq.s32.totalorder %s28, 1
      %p229 = por %p227, %p228
      %p231 = scmp.ne.s32.totalorder %s216, %s230
      %p232 = scmp.eq.s32.totalorder %s28, 0
      %p233 = por %p231, %p232
      %s234 = ssub.s32 %s22, %s29
      %p235 = scmp.eq.s32.totalorder %s234, 0
      %s237 = sadd.s32 %s236, 1
      %s238 = scalar_select %p235, %s236, %s237
      %p241 = pneg %p235
      %p242 = scmp.eq.s32.totalorder %s22, 1
      %p243 = por %p241, %p242
      %p244 = scmp.ne.s32.totalorder %s236, %s239
      %p245 = scmp.eq.s32.totalorder %s22, 0
      %p246 = por %p244, %p245
      %p247 = scmp.ne.s32.totalorder %s236, %s239
      %p248 = scmp.eq.s32.totalorder %s27, 1
      %p249 = por %p247, %p248
      %p250 = scmp.ne.s32.totalorder %s239, %s240
      %p251 = scmp.eq.s32.totalorder %s27, 0
      %p252 = por %p250, %p251
      %p253 = scmp.ne.s32.totalorder %s239, %s240
      %p254 = scmp.eq.s32.totalorder %s28, 1
      %p255 = por %p253, %p254
      %p257 = scmp.ne.s32.totalorder %s240, %s256
      %p258 = scmp.eq.s32.totalorder %s28, 0
      %p259 = por %p257, %p258
      %p260 = scmp.le.s32.totalorder 1, %s22
      %p261 = scmp.lt.s32.totalorder %s22, 3
      %p262 = pnand %p260, %p261
      %p263 = pneg %p262
      // Predicated region
      $region9: #{tpu_custom_call.1} parent=5 // pred_check
        _
      $region10: #{tpu_custom_call.1} parent=5 // pred_check_branch
        %265 = sbr.rel (%p262) target = $region12
      $region11: #{tpu_custom_call.1} parent=5 // pred_region
        %s266 = ssub.s32 %s22, 1
        // Predicated region
        $region13: #{tpu_custom_call.1} parent=11 // pred_check
          %p267 = pneg %p121
        $region14: #{tpu_custom_call.1} parent=11 // pred_check_branch
          %269 = sbr.rel (%p267) target = $region16
        $region15: #{tpu_custom_call.1} parent=11 // pred_region
          %s271 = ssub.s32 64, 64
          %272 = vsyncadd [#allocation6], %s271
          %s274 = sshll.u32 [#allocation5], 4
          %s275 = int_to_ptr.vmem [resolvable:$true] %s274
          %277 = dma.hbm_to_vmem [thread:$0]  %s3, 64, %s275, [#allocation6]
        $region16: #{tpu_custom_call.1} parent=11 // pred_fallthru
          _
        // Predicated region
        $region17: #{tpu_custom_call.1} parent=11 // pred_check
          %p278 = pneg %p142
        $region18: #{tpu_custom_call.1} parent=11 // pred_check_branch
          %280 = sbr.rel (%p278) target = $region20
        $region19: #{tpu_custom_call.1} parent=11 // pred_region
          %s282 = ssub.s32 64, 64
          %283 = vsyncadd [#allocation6], %s282
          %s285 = sshll.u32 [#allocation7], 4
          %s286 = int_to_ptr.vmem [resolvable:$true] %s285
          %288 = dma.hbm_to_vmem [thread:$0]  %s4, 64, %s286, [#allocation6]
        $region20: #{tpu_custom_call.1} parent=11 // pred_fallthru
          _
        // Predicated region
        $region21: #{tpu_custom_call.1} parent=11 // pred_check
          %p289 = pneg %p163
        $region22: #{tpu_custom_call.1} parent=11 // pred_check_branch
          %291 = sbr.rel (%p289) target = $region24
        $region23: #{tpu_custom_call.1} parent=11 // pred_region
          _
        $region24: #{tpu_custom_call.1} parent=11 // pred_fallthru
          _
        // Predicated region
        $region25: #{tpu_custom_call.1} parent=11 // pred_check
          %p292 = pneg %p184
        $region26: #{tpu_custom_call.1} parent=11 // pred_check_branch
          %294 = sbr.rel (%p292) target = $region28
        $region27: #{tpu_custom_call.1} parent=11 // pred_region
          _
        $region28: #{tpu_custom_call.1} parent=11 // pred_fallthru
          _
        // Predicated region
        $region29: #{tpu_custom_call.1} parent=11 // pred_check
          %p295 = pneg %p205
        $region30: #{tpu_custom_call.1} parent=11 // pred_check_branch
          %297 = sbr.rel (%p295) target = $region32
        $region31: #{tpu_custom_call.1} parent=11 // pred_region
          _
        $region32: #{tpu_custom_call.1} parent=11 // pred_fallthru
          _
        // Predicated region
        $region33: #{tpu_custom_call.1} parent=11 // pred_check
          %p298 = pneg %p226
        $region34: #{tpu_custom_call.1} parent=11 // pred_check_branch
          %300 = sbr.rel (%p298) target = $region36
        $region35: #{tpu_custom_call.1} parent=11 // pred_region
          _
        $region36: #{tpu_custom_call.1} parent=11 // pred_fallthru
          _
      $region12: #{tpu_custom_call.1} parent=5 // pred_fallthru
        _
      %p301 = scmp.lt.s32.totalorder %s22, 2
      // Predicated region
      $region37: #{tpu_custom_call.1} parent=5 // pred_check
        %p302 = pneg %p301
      $region38: #{tpu_custom_call.1} parent=5 // pred_check_branch
        %304 = sbr.rel (%p302) target = $region40
      $region39: #{tpu_custom_call.1} parent=5 // pred_region
        // Predicated region
        $region41: #{tpu_custom_call.1} parent=39 // pred_check
          %p305 = pneg %p42
        $region42: #{tpu_custom_call.1} parent=39 // pred_check_branch
          %307 = sbr.rel (%p305) target = $region44
        $region43: #{tpu_custom_call.1} parent=39 // pred_region
          %p308 = scmp.lt.s32.totalorder %s22, 1
          %s309 = scalar_select %p308, %s22, 1
          %s310 = smul.addr %s309, 2
          %s311 = smul.addr %s310, 8
          %s312 = scalar_lea.vmem %s0, %s311
        $region44: #{tpu_custom_call.1} parent=39 // pred_fallthru
          _
        // Predicated region
        $region45: #{tpu_custom_call.1} parent=39 // pred_check
          %p313 = pneg %p68
        $region46: #{tpu_custom_call.1} parent=39 // pred_check_branch
          %315 = sbr.rel (%p313) target = $region48
        $region47: #{tpu_custom_call.1} parent=39 // pred_region
          %s316 = sand.u32 %s58, 1
          %s317 = scalar_lea.sflag [#allocation3], %s316
          %s318 = sand.u32 %s58, 1
          %s319 = smul.addr %s318, 32
          %s320 = scalar_lea.vmem [#allocation2], %s319
          %s322 = ssub.s32 512, 512
          %323 = vsyncadd %s317, %s322
          %s324 = smul.addr %s22, 4
          %s325 = smul.addr %s324, 128
          %s326 = scalar_lea.hbm %s1, %s325
          %s328 = sshll.u32 %s320, 4
          %s329 = int_to_ptr.vmem [resolvable:$true] %s328
          %331 = dma.hbm_to_vmem [thread:$0]  %s326, 512, %s329, %s317
        $region48: #{tpu_custom_call.1} parent=39 // pred_fallthru
          _
        // Predicated region
        $region49: #{tpu_custom_call.1} parent=39 // pred_check
          %p332 = pneg %p94
        $region50: #{tpu_custom_call.1} parent=39 // pred_check_branch
          %334 = sbr.rel (%p332) target = $region52
        $region51: #{tpu_custom_call.1} parent=39 // pred_region
          %p335 = scmp.lt.s32.totalorder %s22, 1
          %s336 = scalar_select %p335, %s22, 1
          %s337 = smul.addr %s336, 2
          %s338 = smul.addr %s337, 8
          %s339 = scalar_lea.vmem %s2, %s338
        $region52: #{tpu_custom_call.1} parent=39 // pred_fallthru
          _
      $region40: #{tpu_custom_call.1} parent=5 // pred_fallthru
        _
      %p340 = scmp.le.s32.totalorder 1, %s22
      %p341 = scmp.lt.s32.totalorder %s22, 3
      %p342 = pnand %p340, %p341
      %p343 = pneg %p342
      // Predicated region
      $region53: #{tpu_custom_call.1} parent=5 // pred_check
        _
      $region54: #{tpu_custom_call.1} parent=5 // pred_check_branch
        %345 = sbr.rel (%p342) target = $region56
      $region55: #{tpu_custom_call.1} parent=5 // pred_region
        %s346 = ssub.s32 %s22, 1
        %s347 = sand.u32 %s61, 1
        %s348 = scalar_lea.sflag [#allocation3], %s347
        %s349 = sand.u32 %s61, 1
        %s350 = smul.addr %s349, 32
        %s351 = scalar_lea.vmem [#allocation2], %s350
        // Predicated region
        $region57: #{tpu_custom_call.1} parent=55 // pred_check
          %p352 = pneg %p74
        $region58: #{tpu_custom_call.1} parent=55 // pred_check_branch
          %354 = sbr.rel (%p352) target = $region60
        $region59: #{tpu_custom_call.1} parent=55 // pred_region
          %355 = dma.done %s348, 512
        $region60: #{tpu_custom_call.1} parent=55 // pred_fallthru
          _
        // Predicated region
        $region61: #{tpu_custom_call.1} parent=55 // pred_check
          %p356 = pneg %p121
        $region62: #{tpu_custom_call.1} parent=55 // pred_check_branch
          %358 = sbr.rel (%p356) target = $region64
        $region63: #{tpu_custom_call.1} parent=55 // pred_region
          %359 = dma.done [#allocation6], 64
        $region64: #{tpu_custom_call.1} parent=55 // pred_fallthru
          _
        // Predicated region
        $region65: #{tpu_custom_call.1} parent=55 // pred_check
          %p360 = pneg %p142
        $region66: #{tpu_custom_call.1} parent=55 // pred_check_branch
          %362 = sbr.rel (%p360) target = $region68
        $region67: #{tpu_custom_call.1} parent=55 // pred_region
          %363 = dma.done [#allocation6], 64
        $region68: #{tpu_custom_call.1} parent=55 // pred_fallthru
          _
        %p364 = scmp.lt.s32.totalorder %s27, 1
        %s365 = scalar_select %p364, %s27, 1
        %s366 = smul.addr %s365, 2
        %s367 = smul.addr %s366, 8
        %s368 = scalar_lea.vmem %s0, %s367
        %p369 = pneg %p48
        %p370 = pneg %p45
        %s371 = sand.u32 %s61, 1
        %s372 = scalar_lea.sflag [#allocation3], %s371
        %s373 = sand.u32 %s61, 1
        %s374 = smul.addr %s373, 32
        %s375 = scalar_lea.vmem [#allocation2], %s374
        %p376 = pneg %p74
        %p377 = pneg %p71
        %p378 = scmp.lt.s32.totalorder %s27, 1
        %s379 = scalar_select %p378, %s27, 1
        %s380 = smul.addr %s379, 2
        %s381 = smul.addr %s380, 8
        %s382 = scalar_lea.vmem %s2, %s381
        %p383 = pneg %p100
        %p384 = pneg %p97
        %p385 = pneg %p121
        %p386 = pneg %p118
        %p387 = pneg %p142
        %p388 = pneg %p139
        %p389 = pneg %p163
        %p390 = pneg %p160
        %p391 = pneg %p184
        %p392 = pneg %p181
        %p393 = pneg %p205
        %p394 = pneg %p202
        %p395 = pneg %p226
        %p396 = pneg %p223
        %p397 = pneg %p252
        %p398 = pneg %p249
        %s399 = sand.u32 %s239, 1
        %s400 = scalar_lea.sflag [#allocation4], %s399
        %s401 = sand.u32 %s239, 1
        %s402 = smul.addr %s401, 64
        %s403 = scalar_lea.vmem [#allocation8], %s402
        %p404 = scmp.lt.s32.totalorder %s27, 1
        %s405 = scalar_select %p404, %s27, 1
        %s406 = smul.addr %s405, 2
        %s407 = smul.addr %s406, 8
        %s408 = scalar_lea.vmem %s0, %s407
        %p409 = scmp.lt.s32.totalorder %s27, 1
        %s410 = scalar_select %p409, %s27, 1
        %s411 = smul.addr %s410, 2
        %s412 = smul.addr %s411, 8
        %s413 = scalar_lea.vmem %s2, %s412
        %v415 = vld [vmem:[%s408] sm:$0xff]
        %v416 = vld [vmem:[%s408 + $0x8] sm:$0xff]
        %v417 = vld [vmem:[%s351] sm:$0xff]
        %v418 = vld [vmem:[%s351 + $0x8] sm:$0xff]
        %v419 = vld [vmem:[%s351 + $0x10] sm:$0xff]
        %v420 = vld [vmem:[%s351 + $0x18] sm:$0xff]
        %v421 = vld [vmem:[%s413] sm:$0xff]
        %v422 = vld [vmem:[%s413 + $0x8] sm:$0xff]
        %v423 = vlaneseq
        %v424 = vand.u32 %v423, 127
        %vm425 = vcmp.eq.s32.totalorder %v424, 0
        %v426 = vsel %vm425, 0.0, 1.0
        %vm427 = vcmp.eq.s32.totalorder %v424, 127
        %v428 = vsel %vm427, 0.0, 1.0
        %v429 = vld [vmem:[%s7] sm:$0xff]
        %v430 = vld [vmem:[%s7 + $0x8] sm:$0xff]
        %431 = vrot.lane.b32.xlu0 %v415, 1
        %v432 = vpop.permute.xlu0 %431
        %433 = vrot.lane.b32.xlu0 %v416, 1
        %v434 = vpop.permute.xlu0 %433
        %vm435 = vcmp.lt.s32.totalorder %v424, 1
        %v436 = vsel %vm435, %v432, %v434
        %v437 = vsel %vm435, %v434, %v432
        %v438 = vlaneseq
        %v439 = vshrl.u32 %v438, 7
        %v440 = vsub.s32 0, %v439
        %v441 = vrot.slane %v426, %v440
        %v442 = vmul.f32 %v437, %v441
        %v443 = vmul.f32 %v436, %v441
        %v444 = vld [vmem:[#allocation5] sm:$0xf]
        %v445 = vpack.c.bf16 %v442, %v415
        %v446 = vpack.c.bf16 %v443, %v416
        %448 = vset.pattern.permute.xlu0 0
        %449 = vperm.xlu0 %448, %v429
        %v450 = vpop.permute.xlu0 %449
        %vm452 = vcmask 130048
        %v454 = vsel %vm452, %v444, 0
        %456 = vmatprep.subr.bf16.mxu0 %v446
        %457 = vmatpush1.bf16.msra.mxu0 %v445
        %458 = vmatprep.subr.bf16.mxu0 0
        %459 = vmatpush1.bf16.msra.mxu0 0
        %460 = vmatprep.subr.bf16.mxu0 0
        %461 = vmatpush1.bf16.msra.mxu0 0
        %462 = vmatprep.subr.bf16.mxu0 0
        %463 = vmatpush1.bf16.msra.mxu0 0
        %464 = vmatprep.subr.bf16.mxu0 0
        %465 = vmatpush1.bf16.msra.mxu0 0
        %466 = vmatprep.subr.bf16.mxu0 0
        %467 = vmatpush1.bf16.msra.mxu0 0
        %468 = vmatprep.subr.bf16.mxu0 0
        %469 = vmatpush1.bf16.msra.mxu0 0
        %470 = vmatprep.subr.bf16.mxu0 0
        %471 = vmatpush1.bf16.msra.mxu0 0
        %472 = vmatprep.subr.bf16.mxu0 0
        %473 = vmatpush1.bf16.msra.mxu0 0
        %474 = vmatprep.subr.bf16.mxu0 0
        %475 = vmatpush1.bf16.msra.mxu0 0
        %476 = vmatprep.subr.bf16.mxu0 0
        %477 = vmatpush1.bf16.msra.mxu0 0
        %478 = vmatprep.subr.bf16.mxu0 0
        %479 = vmatpush1.bf16.msra.mxu0 0
        %480 = vmatprep.subr.bf16.mxu0 0
        %481 = vmatpush1.bf16.msra.mxu0 0
        %482 = vmatprep.subr.bf16.mxu0 0
        %483 = vmatpush1.bf16.msra.mxu0 0
        %484 = vmatprep.subr.bf16.mxu0 0
        %485 = vmatpush1.bf16.msra.mxu0 0
        %486 = vmatprep.subr.bf16.mxu0 0
        %487 = vmatpush1.bf16.msra.mxu0 0
        %488 = vmatprep.mubr.bf16.mxu0 0
        %489 = vmatmul.mubr.bf16.gmra.mrb[0].mxu0 %v454
        %v490 = vpop.f32.mrb[0].mxu0
        %v491 = vadd.f32 %v450, %v490
        %v492 = vpop.f32.mrb[0].mxu0
        %v493 = vadd.f32 %v450, %v492
        %v494 = vpop.f32.mrb[0].mxu0
        %v495 = vpop.f32.mrb[0].mxu0
        %496 = vdwg.mxu0
        %497 = vrot.lane.b32.xlu0 %v415, 127
        %v498 = vpop.permute.xlu0 %497
        %499 = vrot.lane.b32.xlu0 %v416, 127
        %v500 = vpop.permute.xlu0 %499
        %vm501 = vcmp.lt.s32.totalorder %v424, 127
        %v502 = vsel %vm501, %v498, %v500
        %v503 = vsel %vm501, %v500, %v498
        %v504 = vlaneseq
        %v505 = vshrl.u32 %v504, 7
        %v506 = vsub.s32 0, %v505
        %v507 = vrot.slane %v428, %v506
        %v508 = vmul.f32 %v502, %v507
        %v509 = vmul.f32 %v503, %v507
        %v510 = vld [vmem:[#allocation7] sm:$0xf]
        %v511 = vpack.c.bf16 %v508, %v415
        %v512 = vpack.c.bf16 %v509, %v416
        %v514 = vsel %vm452, %v510, 0
        %516 = vmatprep.subr.bf16.mxu0 %v512
        %517 = vmatpush1.bf16.msra.mxu0 %v511
        %518 = vmatprep.subr.bf16.mxu0 0
        %519 = vmatpush1.bf16.msra.mxu0 0
        %520 = vmatprep.subr.bf16.mxu0 0
        %521 = vmatpush1.bf16.msra.mxu0 0
        %522 = vmatprep.subr.bf16.mxu0 0
        %523 = vmatpush1.bf16.msra.mxu0 0
        %524 = vmatprep.subr.bf16.mxu0 0
        %525 = vmatpush1.bf16.msra.mxu0 0
        %526 = vmatprep.subr.bf16.mxu0 0
        %527 = vmatpush1.bf16.msra.mxu0 0
        %528 = vmatprep.subr.bf16.mxu0 0
        %529 = vmatpush1.bf16.msra.mxu0 0
        %530 = vmatprep.subr.bf16.mxu0 0
        %531 = vmatpush1.bf16.msra.mxu0 0
        %532 = vmatprep.subr.bf16.mxu0 0
        %533 = vmatpush1.bf16.msra.mxu0 0
        %534 = vmatprep.subr.bf16.mxu0 0
        %535 = vmatpush1.bf16.msra.mxu0 0
        %536 = vmatprep.subr.bf16.mxu0 0
        %537 = vmatpush1.bf16.msra.mxu0 0
        %538 = vmatprep.subr.bf16.mxu0 0
        %539 = vmatpush1.bf16.msra.mxu0 0
        %540 = vmatprep.subr.bf16.mxu0 0
        %541 = vmatpush1.bf16.msra.mxu0 0
        %542 = vmatprep.subr.bf16.mxu0 0
        %543 = vmatpush1.bf16.msra.mxu0 0
        %544 = vmatprep.subr.bf16.mxu0 0
        %545 = vmatpush1.bf16.msra.mxu0 0
        %546 = vmatprep.subr.bf16.mxu0 0
        %547 = vmatpush1.bf16.msra.mxu0 0
        %548 = vmatprep.mubr.bf16.mxu0 0
        %549 = vmatmul.mubr.bf16.gmra.mrb[0].mxu0 %v514
        %v550 = vpop.f32.mrb[0].mxu0
        %v551 = vadd.f32 %v450, %v550
        %v552 = vpop.f32.mrb[0].mxu0
        %v553 = vadd.f32 %v450, %v552
        %v554 = vpop.f32.mrb[0].mxu0
        %v555 = vpop.f32.mrb[0].mxu0
        %556 = vdwg.mxu0
        %557 = vrot.lane.b32.xlu0 %v551, 1
        %v558 = vpop.permute.xlu0 %557
        %559 = vrot.lane.b32.xlu0 %v419, 1
        %v560 = vpop.permute.xlu0 %559
        %561 = vrot.lane.b32.xlu0 %v553, 1
        %v562 = vpop.permute.xlu0 %561
        %563 = vrot.lane.b32.xlu0 %v420, 1
        %v564 = vpop.permute.xlu0 %563
        %v565 = vsel %vm435, %v558, %v562
        %v566 = vsel %vm435, %v560, %v564
        %v567 = vsel %vm435, %v562, %v558
        %v568 = vsel %vm435, %v564, %v560
        %v569 = vmul.f32 %v567, %v441
        %v570 = vmul.f32 %v565, %v441
        %v571 = vmul.f32 %v568, %v441
        %v572 = vmul.f32 %v566, %v441
        %v573 = vld [vmem:[%s5] sm:$0xf]
        %v574 = vld [vmem:[%s5 + $0x4] sm:$0xf]
        %v575 = vpack.c.bf16 %v571, %v569
        %v576 = vpack.c.bf16 %v572, %v570
        %v577 = vpack.c.bf16 %v417, %v491
        %v578 = vpack.c.bf16 %v418, %v493
        %v579 = vpack.c.bf16 %v419, %v551
        %v580 = vpack.c.bf16 %v420, %v553
        %581 = vset.pattern.permute.xlu0 1
        %582 = vperm.xlu0 %581, %v429
        %v583 = vpop.permute.xlu0 %582
        %586 = vset.pattern.permute.xlu0 1
        %587 = vperm.xlu0 %586, %v430
        %v588 = vpop.permute.xlu0 %587
        %v592 = vunpack.c.l.b16 %v573
        %v593 = vunpack.c.l.b16 %v574
        %v594 = vpack.c.b16 %v593, %v592
        %vm595 = vcmask 392192
        %v597 = vsel %vm595, %v594, 0
        %599 = vmatprep.subr.bf16.mxu0 %v576
        %600 = vmatpush1.bf16.msra.mxu0 %v575
        %601 = vmatprep.subr.bf16.mxu0 %v578
        %602 = vmatpush1.bf16.msra.mxu0 %v577
        %603 = vmatprep.subr.bf16.mxu0 %v580
        %604 = vmatpush1.bf16.msra.mxu0 %v579
        %605 = vmatprep.subr.bf16.mxu0 0
        %606 = vmatpush1.bf16.msra.mxu0 0
        %607 = vmatprep.subr.bf16.mxu0 0
        %608 = vmatpush1.bf16.msra.mxu0 0
        %609 = vmatprep.subr.bf16.mxu0 0
        %610 = vmatpush1.bf16.msra.mxu0 0
        %611 = vmatprep.subr.bf16.mxu0 0
        %612 = vmatpush1.bf16.msra.mxu0 0
        %613 = vmatprep.subr.bf16.mxu0 0
        %614 = vmatpush1.bf16.msra.mxu0 0
        %615 = vmatprep.subr.bf16.mxu0 0
        %616 = vmatpush1.bf16.msra.mxu0 0
        %617 = vmatprep.subr.bf16.mxu0 0
        %618 = vmatpush1.bf16.msra.mxu0 0
        %619 = vmatprep.subr.bf16.mxu0 0
        %620 = vmatpush1.bf16.msra.mxu0 0
        %621 = vmatprep.subr.bf16.mxu0 0
        %622 = vmatpush1.bf16.msra.mxu0 0
        %623 = vmatprep.subr.bf16.mxu0 0
        %624 = vmatpush1.bf16.msra.mxu0 0
        %625 = vmatprep.subr.bf16.mxu0 0
        %626 = vmatpush1.bf16.msra.mxu0 0
        %627 = vmatprep.subr.bf16.mxu0 0
        %628 = vmatpush1.bf16.msra.mxu0 0
        %629 = vmatprep.subr.bf16.mxu0 0
        %630 = vmatpush1.bf16.msra.mxu0 0
        %631 = vmatprep.mubr.bf16.mxu0 0
        %632 = vmatmul.mubr.bf16.gmra.mrb[0].mxu0 %v597
        %v633 = vpop.f32.mrb[0].mxu0
        %v634 = vadd.f32 %v583, %v633
        %v635 = vpop.f32.mrb[0].mxu0
        %v636 = vadd.f32 %v583, %v635
        %v637 = vpop.f32.mrb[0].mxu0
        %v638 = vadd.f32 %v588, %v637
        %v639 = vpop.f32.mrb[0].mxu0
        %v640 = vadd.f32 %v588, %v639
        %641 = vdwg.mxu0
        %642 = vrot.lane.b32.xlu0 %v491, 127
        %v643 = vpop.permute.xlu0 %642
        %644 = vrot.lane.b32.xlu0 %v417, 127
        %v645 = vpop.permute.xlu0 %644
        %646 = vrot.lane.b32.xlu0 %v493, 127
        %v647 = vpop.permute.xlu0 %646
        %648 = vrot.lane.b32.xlu0 %v418, 127
        %v649 = vpop.permute.xlu0 %648
        %v650 = vsel %vm501, %v643, %v647
        %v651 = vsel %vm501, %v645, %v649
        %v652 = vsel %vm501, %v647, %v643
        %v653 = vsel %vm501, %v649, %v645
        %v654 = vmul.f32 %v650, %v507
        %v655 = vmul.f32 %v652, %v507
        %v656 = vmul.f32 %v651, %v507
        %v657 = vmul.f32 %v653, %v507
        %v658 = vpack.c.bf16 %v656, %v654
        %v659 = vpack.c.bf16 %v657, %v655
        %660 = vmatprep.subr.bf16.mxu0 %v578
        %661 = vmatpush1.bf16.msra.mxu0 %v577
        %662 = vmatprep.subr.bf16.mxu0 %v580
        %663 = vmatpush1.bf16.msra.mxu0 %v579
        %664 = vmatprep.subr.bf16.mxu0 %v659
        %665 = vmatpush1.bf16.msra.mxu0 %v658
        %666 = vmatprep.subr.bf16.mxu0 0
        %667 = vmatpush1.bf16.msra.mxu0 0
        %668 = vmatprep.subr.bf16.mxu0 0
        %669 = vmatpush1.bf16.msra.mxu0 0
        %670 = vmatprep.subr.bf16.mxu0 0
        %671 = vmatpush1.bf16.msra.mxu0 0
        %672 = vmatprep.subr.bf16.mxu0 0
        %673 = vmatpush1.bf16.msra.mxu0 0
        %674 = vmatprep.subr.bf16.mxu0 0
        %675 = vmatpush1.bf16.msra.mxu0 0
        %676 = vmatprep.subr.bf16.mxu0 0
        %677 = vmatpush1.bf16.msra.mxu0 0
        %678 = vmatprep.subr.bf16.mxu0 0
        %679 = vmatpush1.bf16.msra.mxu0 0
        %680 = vmatprep.subr.bf16.mxu0 0
        %681 = vmatpush1.bf16.msra.mxu0 0
        %682 = vmatprep.subr.bf16.mxu0 0
        %683 = vmatpush1.bf16.msra.mxu0 0
        %684 = vmatprep.subr.bf16.mxu0 0
        %685 = vmatpush1.bf16.msra.mxu0 0
        %686 = vmatprep.subr.bf16.mxu0 0
        %687 = vmatpush1.bf16.msra.mxu0 0
        %688 = vmatprep.subr.bf16.mxu0 0
        %689 = vmatpush1.bf16.msra.mxu0 0
        %690 = vmatprep.subr.bf16.mxu0 0
        %691 = vmatpush1.bf16.msra.mxu0 0
        %692 = vmatprep.mubr.bf16.mxu0 0
        %693 = vmatmul.mubr.bf16.gmra.mrb[0].mxu0 %v597
        %v694 = vpop.f32.mrb[0].mxu0
        %v695 = vadd.f32 %v583, %v694
        %v696 = vpop.f32.mrb[0].mxu0
        %v697 = vadd.f32 %v583, %v696
        %v698 = vpop.f32.mrb[0].mxu0
        %v699 = vadd.f32 %v588, %v698
        %v700 = vpop.f32.mrb[0].mxu0
        %v701 = vadd.f32 %v588, %v700
        %702 = vdwg.mxu0
        %703 = vadd.xlane.f32.xlu0 %v634
        %v704 = vpop.xlane.xlu0 %703
        %705 = vadd.xlane.f32.xlu0 %v638
        %v706 = vpop.xlane.xlu0 %705
        %707 = vadd.xlane.f32.xlu0 %v636
        %v708 = vpop.xlane.xlu0 %707
        %709 = vadd.xlane.f32.xlu0 %v640
        %v710 = vpop.xlane.xlu0 %709
        %vm711 = vcmask 7168
        %v712 = vsel %vm711, %v704, %v708
        %v713 = vsel %vm711, %v706, %v710
        %714 = vadd.xlane.f32.xlu0 %v695
        %v715 = vpop.xlane.xlu0 %714
        %716 = vadd.xlane.f32.xlu0 %v699
        %v717 = vpop.xlane.xlu0 %716
        %718 = vadd.xlane.f32.xlu0 %v697
        %v719 = vpop.xlane.xlu0 %718
        %720 = vadd.xlane.f32.xlu0 %v701
        %v721 = vpop.xlane.xlu0 %720
        %v722 = vsel %vm711, %v715, %v719
        %v723 = vsel %vm711, %v717, %v721
        %v724 = vadd.f32 %v712, %v722
        %v725 = vadd.f32 %v713, %v723
        %v726 = vld [vmem:[%s8] sm:$0xff]
        %v727 = vld [vmem:[%s8 + $0x8] sm:$0xff]
        %v729 = vsel %vm452, %v726, 0
        %v732 = vsel %vm452, %v727, 0
        %734 = vmatprep.subr.mxu0 0.0
        %735 = vmatpush1.msra.mxu0 %v724
        %736 = vmatprep.subr.mxu0 0.0
        %737 = vmatpush1.msra.mxu0 %v725
        %738 = vmatprep.subr.mxu0 0.0
        %739 = vmatpush1.msra.mxu0 0.0
        %740 = vmatprep.subr.mxu0 0.0
        %741 = vmatpush1.msra.mxu0 0.0
        %742 = vmatprep.subr.mxu0 0.0
        %743 = vmatpush1.msra.mxu0 0.0
        %744 = vmatprep.subr.mxu0 0.0
        %745 = vmatpush1.msra.mxu0 0.0
        %746 = vmatprep.subr.mxu0 0.0
        %747 = vmatpush1.msra.mxu0 0.0
        %748 = vmatprep.subr.mxu0 0.0
        %749 = vmatpush1.msra.mxu0 0.0
        %750 = vmatprep.subr.mxu0 0.0
        %751 = vmatpush1.msra.mxu0 0.0
        %752 = vmatprep.subr.mxu0 0.0
        %753 = vmatpush1.msra.mxu0 0.0
        %754 = vmatprep.subr.mxu0 0.0
        %755 = vmatpush1.msra.mxu0 0.0
        %756 = vmatprep.subr.mxu0 0.0
        %757 = vmatpush1.msra.mxu0 0.0
        %758 = vmatprep.subr.mxu0 0.0
        %759 = vmatpush1.msra.mxu0 0.0
        %760 = vmatprep.subr.mxu0 0.0
        %761 = vmatpush1.msra.mxu0 0.0
        %762 = vmatprep.subr.mxu0 0.0
        %763 = vmatpush1.msra.mxu0 0.0
        %764 = vmatprep.subr.mxu0 0.0
        %765 = vmatpush1.msra.mxu0 0.0
        %766 = vmatprep.subr.mxu0 0.0
        %767 = vmatpush1.msra.mxu0 0.0
        %768 = vmatprep.subr.mxu0 0.0
        %769 = vmatpush1.msra.mxu0 0.0
        %770 = vmatprep.subr.mxu0 0.0
        %771 = vmatpush1.msra.mxu0 0.0
        %772 = vmatprep.subr.mxu0 0.0
        %773 = vmatpush1.msra.mxu0 0.0
        %774 = vmatprep.subr.mxu0 0.0
        %775 = vmatpush1.msra.mxu0 0.0
        %776 = vmatprep.subr.mxu0 0.0
        %777 = vmatpush1.msra.mxu0 0.0
        %778 = vmatprep.subr.mxu0 0.0
        %779 = vmatpush1.msra.mxu0 0.0
        %780 = vmatprep.subr.mxu0 0.0
        %781 = vmatpush1.msra.mxu0 0.0
        %782 = vmatprep.subr.mxu0 0.0
        %783 = vmatpush1.msra.mxu0 0.0
        %784 = vmatprep.subr.mxu0 0.0
        %785 = vmatpush1.msra.mxu0 0.0
        %786 = vmatprep.subr.mxu0 0.0
        %787 = vmatpush1.msra.mxu0 0.0
        %788 = vmatprep.subr.mxu0 0.0
        %789 = vmatpush1.msra.mxu0 0.0
        %790 = vmatprep.subr.mxu0 0.0
        %791 = vmatpush1.msra.mxu0 0.0
        %792 = vmatprep.subr.mxu0 0.0
        %793 = vmatpush1.msra.mxu0 0.0
        %794 = vmatprep.subr.mxu0 0.0
        %795 = vmatpush1.msra.mxu0 0.0
        %796 = vmatprep.subr.mxu0 0.0
        %797 = vmatpush1.msra.mxu0 0.0
        %798 = vmatprep.mubr.f32.mxu0 0.0
        %799 = vmatmul.mubr.f32.gmra.mrb[0].mxu0 %v729
        %v800 = vpop.f32.mrb[0].mxu0
        %v801 = vadd.f32 0.0, %v800
        %v802 = vpop.f32.mrb[0].mxu0
        %803 = vmatprep.mubr.f32.mxu0 0.0
        %804 = vmatmul.mubr.f32.gmra.mrb[0].mxu0 %v732
        %v805 = vpop.f32.mrb[0].mxu0
        %v806 = vadd.f32 0.0, %v805
        %v807 = vpop.f32.mrb[0].mxu0
        %808 = vdwg.mxu0
        %810 = vset.pattern.permute.xlu0 0
        %811 = vperm.xlu0 %810, %v801
        %v812 = vpop.permute.xlu0 %811
        %815 = vset.pattern.permute.xlu0 0
        %816 = vperm.xlu0 %815, %v806
        %v817 = vpop.permute.xlu0 %816
        %819 = vset.pattern.permute.xlu0 1
        %820 = vperm.xlu0 %819, %v801
        %v821 = vpop.permute.xlu0 %820
        %823 = vset.pattern.permute.xlu0 1
        %824 = vperm.xlu0 %823, %v806
        %v825 = vpop.permute.xlu0 %824
        %v827 = vsub.f32 %v634, %v812
        %v828 = vsub.f32 %v636, %v821
        %v829 = vsub.f32 %v638, %v817
        %v830 = vsub.f32 %v640, %v825
        %v831 = vsub.f32 %v695, %v812
        %v832 = vsub.f32 %v697, %v821
        %v833 = vsub.f32 %v699, %v817
        %v834 = vsub.f32 %v701, %v825
        %v835 = vmul.f32 %v827, %v827
        %v836 = vmul.f32 %v828, %v828
        %v837 = vmul.f32 %v829, %v829
        %v838 = vmul.f32 %v830, %v830
        %839 = vadd.xlane.f32.xlu0 %v835
        %v840 = vpop.xlane.xlu0 %839
        %841 = vadd.xlane.f32.xlu0 %v837
        %v842 = vpop.xlane.xlu0 %841
        %843 = vadd.xlane.f32.xlu0 %v836
        %v844 = vpop.xlane.xlu0 %843
        %845 = vadd.xlane.f32.xlu0 %v838
        %v846 = vpop.xlane.xlu0 %845
        %v847 = vsel %vm711, %v840, %v844
        %v848 = vsel %vm711, %v842, %v846
        %v849 = vmul.f32 %v831, %v831
        %v850 = vmul.f32 %v832, %v832
        %v851 = vmul.f32 %v833, %v833
        %v852 = vmul.f32 %v834, %v834
        %853 = vadd.xlane.f32.xlu0 %v849
        %v854 = vpop.xlane.xlu0 %853
        %855 = vadd.xlane.f32.xlu0 %v851
        %v856 = vpop.xlane.xlu0 %855
        %857 = vadd.xlane.f32.xlu0 %v850
        %v858 = vpop.xlane.xlu0 %857
        %859 = vadd.xlane.f32.xlu0 %v852
        %v860 = vpop.xlane.xlu0 %859
        %v861 = vsel %vm711, %v854, %v858
        %v862 = vsel %vm711, %v856, %v860
        %v863 = vadd.f32 %v847, %v861
        %v864 = vadd.f32 %v848, %v862
        %865 = vmatprep.subr.mxu0 0.0
        %866 = vmatpush1.msra.mxu0 %v863
        %867 = vmatprep.subr.mxu0 0.0
        %868 = vmatpush1.msra.mxu0 %v864
        %869 = vmatprep.subr.mxu0 0.0
        %870 = vmatpush1.msra.mxu0 0.0
        %871 = vmatprep.subr.mxu0 0.0
        %872 = vmatpush1.msra.mxu0 0.0
        %873 = vmatprep.subr.mxu0 0.0
        %874 = vmatpush1.msra.mxu0 0.0
        %875 = vmatprep.subr.mxu0 0.0
        %876 = vmatpush1.msra.mxu0 0.0
        %877 = vmatprep.subr.mxu0 0.0
        %878 = vmatpush1.msra.mxu0 0.0
        %879 = vmatprep.subr.mxu0 0.0
        %880 = vmatpush1.msra.mxu0 0.0
        %881 = vmatprep.subr.mxu0 0.0
        %882 = vmatpush1.msra.mxu0 0.0
        %883 = vmatprep.subr.mxu0 0.0
        %884 = vmatpush1.msra.mxu0 0.0
        %885 = vmatprep.subr.mxu0 0.0
        %886 = vmatpush1.msra.mxu0 0.0
        %887 = vmatprep.subr.mxu0 0.0
        %888 = vmatpush1.msra.mxu0 0.0
        %889 = vmatprep.subr.mxu0 0.0
        %890 = vmatpush1.msra.mxu0 0.0
        %891 = vmatprep.subr.mxu0 0.0
        %892 = vmatpush1.msra.mxu0 0.0
        %893 = vmatprep.subr.mxu0 0.0
        %894 = vmatpush1.msra.mxu0 0.0
        %895 = vmatprep.subr.mxu0 0.0
        %896 = vmatpush1.msra.mxu0 0.0
        %897 = vmatprep.subr.mxu0 0.0
        %898 = vmatpush1.msra.mxu0 0.0
        %899 = vmatprep.subr.mxu0 0.0
        %900 = vmatpush1.msra.mxu0 0.0
        %901 = vmatprep.subr.mxu0 0.0
        %902 = vmatpush1.msra.mxu0 0.0
        %903 = vmatprep.subr.mxu0 0.0
        %904 = vmatpush1.msra.mxu0 0.0
        %905 = vmatprep.subr.mxu0 0.0
        %906 = vmatpush1.msra.mxu0 0.0
        %907 = vmatprep.subr.mxu0 0.0
        %908 = vmatpush1.msra.mxu0 0.0
        %909 = vmatprep.subr.mxu0 0.0
        %910 = vmatpush1.msra.mxu0 0.0
        %911 = vmatprep.subr.mxu0 0.0
        %912 = vmatpush1.msra.mxu0 0.0
        %913 = vmatprep.subr.mxu0 0.0
        %914 = vmatpush1.msra.mxu0 0.0
        %915 = vmatprep.subr.mxu0 0.0
        %916 = vmatpush1.msra.mxu0 0.0
        %917 = vmatprep.subr.mxu0 0.0
        %918 = vmatpush1.msra.mxu0 0.0
        %919 = vmatprep.subr.mxu0 0.0
        %920 = vmatpush1.msra.mxu0 0.0
        %921 = vmatprep.subr.mxu0 0.0
        %922 = vmatpush1.msra.mxu0 0.0
        %923 = vmatprep.subr.mxu0 0.0
        %924 = vmatpush1.msra.mxu0 0.0
        %925 = vmatprep.subr.mxu0 0.0
        %926 = vmatpush1.msra.mxu0 0.0
        %927 = vmatprep.subr.mxu0 0.0
        %928 = vmatpush1.msra.mxu0 0.0
        %929 = vmatprep.mubr.f32.mxu0 0.0
        %930 = vmatmul.mubr.f32.gmra.mrb[0].mxu0 %v729
        %v931 = vpop.f32.mrb[0].mxu0
        %v932 = vadd.f32 1e-05, %v931
        %v933 = vpop.f32.mrb[0].mxu0
        %934 = vmatprep.mubr.f32.mxu0 0.0
        %935 = vmatmul.mubr.f32.gmra.mrb[0].mxu0 %v732
        %v936 = vpop.f32.mrb[0].mxu0
        %v937 = vadd.f32 1e-05, %v936
        %v938 = vpop.f32.mrb[0].mxu0
        %939 = vdwg.mxu0
        %v940 = vrsqrt.pop %v932
        %v941 = vrsqrt.pop %v937
        %942 = vset.pattern.permute.xlu0 2
        %943 = vperm.xlu0 %942, %v429
        %v944 = vpop.permute.xlu0 %943
        %946 = vset.pattern.permute.xlu0 2
        %947 = vperm.xlu0 %946, %v430
        %v948 = vpop.permute.xlu0 %947
        %v950 = vmul.f32 %v944, %v940
        %v951 = vmul.f32 %v948, %v941
        %953 = vset.pattern.permute.xlu0 0
        %954 = vperm.xlu0 %953, %v950
        %v955 = vpop.permute.xlu0 %954
        %958 = vset.pattern.permute.xlu0 0
        %959 = vperm.xlu0 %958, %v951
        %v960 = vpop.permute.xlu0 %959
        %962 = vset.pattern.permute.xlu0 1
        %963 = vperm.xlu0 %962, %v950
        %v964 = vpop.permute.xlu0 %963
        %966 = vset.pattern.permute.xlu0 1
        %967 = vperm.xlu0 %966, %v951
        %v968 = vpop.permute.xlu0 %967
        %v970 = vmul.f32 %v827, %v955
        %v971 = vmul.f32 %v828, %v964
        %v972 = vmul.f32 %v829, %v960
        %v973 = vmul.f32 %v830, %v968
        %974 = vset.pattern.permute.xlu0 3
        %975 = vperm.xlu0 %974, %v429
        %v976 = vpop.permute.xlu0 %975
        %978 = vset.pattern.permute.xlu0 3
        %979 = vperm.xlu0 %978, %v430
        %v980 = vpop.permute.xlu0 %979
        %v982 = vadd.f32 %v970, %v976
        %v983 = vadd.f32 %v971, %v976
        %v984 = vadd.f32 %v972, %v980
        %v985 = vadd.f32 %v973, %v980
        %v986 = vmul.f32 %v831, %v955
        %v987 = vmul.f32 %v832, %v964
        %v988 = vmul.f32 %v833, %v960
        %v989 = vmul.f32 %v834, %v968
        %v990 = vadd.f32 %v986, %v976
        %v991 = vadd.f32 %v987, %v976
        %v992 = vadd.f32 %v988, %v980
        %v993 = vadd.f32 %v989, %v980
        %v994 = vxor.u32 %v982, 2147483648
        %v995 = vxor.u32 %v983, 2147483648
        %v996 = vxor.u32 %v984, 2147483648
        %v997 = vxor.u32 %v985, 2147483648
        %v998 = vmul.f32 %v994, 1.442695
        %v999 = vpow.pop %v998
        %v1000 = vmul.f32 %v995, 1.442695
        %v1001 = vpow.pop %v1000
        %v1002 = vmul.f32 %v996, 1.442695
        %v1003 = vpow.pop %v1002
        %v1004 = vmul.f32 %v997, 1.442695
        %v1005 = vpow.pop %v1004
        %v1006 = vadd.f32 %v999, 1.0
        %v1007 = vadd.f32 %v1001, 1.0
        %v1008 = vadd.f32 %v1003, 1.0
        %v1009 = vadd.f32 %v1005, 1.0
        %v1010 = vrcp.pop %v1006
        %v1011 = vmul.f32 1.0, %v1010
        %v1012 = vrcp.pop %v1007
        %v1013 = vmul.f32 1.0, %v1012
        %v1014 = vrcp.pop %v1008
        %v1015 = vmul.f32 1.0, %v1014
        %v1016 = vrcp.pop %v1009
        %v1017 = vmul.f32 1.0, %v1016
        %v1018 = vmul.f32 %v982, %v1011
        %v1019 = vmul.f32 %v983, %v1013
        %v1020 = vmul.f32 %v984, %v1015
        %v1021 = vmul.f32 %v985, %v1017
        %v1022 = vxor.u32 %v990, 2147483648
        %v1023 = vxor.u32 %v991, 2147483648
        %v1024 = vxor.u32 %v992, 2147483648
        %v1025 = vxor.u32 %v993, 2147483648
        %v1026 = vmul.f32 %v1022, 1.442695
        %v1027 = vpow.pop %v1026
        %v1028 = vmul.f32 %v1023, 1.442695
        %v1029 = vpow.pop %v1028
        %v1030 = vmul.f32 %v1024, 1.442695
        %v1031 = vpow.pop %v1030
        %v1032 = vmul.f32 %v1025, 1.442695
        %v1033 = vpow.pop %v1032
        %v1034 = vadd.f32 %v1027, 1.0
        %v1035 = vadd.f32 %v1029, 1.0
        %v1036 = vadd.f32 %v1031, 1.0
        %v1037 = vadd.f32 %v1033, 1.0
        %v1038 = vrcp.pop %v1034
        %v1039 = vmul.f32 1.0, %v1038
        %v1040 = vrcp.pop %v1035
        %v1041 = vmul.f32 1.0, %v1040
        %v1042 = vrcp.pop %v1036
        %v1043 = vmul.f32 1.0, %v1042
        %v1044 = vrcp.pop %v1037
        %v1045 = vmul.f32 1.0, %v1044
        %v1046 = vmul.f32 %v990, %v1039
        %v1047 = vmul.f32 %v991, %v1041
        %v1048 = vmul.f32 %v992, %v1043
        %v1049 = vmul.f32 %v993, %v1045
        %1050 = vrot.lane.b32.xlu0 %v1046, 1
        %v1051 = vpop.permute.xlu0 %1050
        %1052 = vrot.lane.b32.xlu0 %v1048, 1
        %v1053 = vpop.permute.xlu0 %1052
        %1054 = vrot.lane.b32.xlu0 %v1047, 1
        %v1055 = vpop.permute.xlu0 %1054
        %1056 = vrot.lane.b32.xlu0 %v1049, 1
        %v1057 = vpop.permute.xlu0 %1056
        %v1058 = vsel %vm435, %v1051, %v1055
        %v1059 = vsel %vm435, %v1053, %v1057
        %v1060 = vsel %vm435, %v1055, %v1051
        %v1061 = vsel %vm435, %v1057, %v1053
        %v1062 = vmul.f32 %v1060, %v441
        %v1063 = vmul.f32 %v1058, %v441
        %v1064 = vmul.f32 %v1061, %v441
        %v1065 = vmul.f32 %v1059, %v441
        %v1066 = vld [vmem:[%s6] sm:$0xf]
        %v1067 = vld [vmem:[%s6 + $0x4] sm:$0xf]
        %v1068 = vpack.c.bf16 %v1064, %v1062
        %v1069 = vpack.c.bf16 %v1065, %v1063
        %v1070 = vpack.c.bf16 %v1020, %v1018
        %v1071 = vpack.c.bf16 %v1021, %v1019
        %v1072 = vpack.c.bf16 %v1048, %v1046
        %v1073 = vpack.c.bf16 %v1049, %v1047
        %1074 = vset.pattern.permute.xlu0 4
        %1075 = vperm.xlu0 %1074, %v429
        %v1076 = vpop.permute.xlu0 %1075
        %1078 = vset.pattern.permute.xlu0 4
        %1079 = vperm.xlu0 %1078, %v430
        %v1080 = vpop.permute.xlu0 %1079
        %v1084 = vunpack.c.l.b16 %v1066
        %v1085 = vunpack.c.l.b16 %v1067
        %v1086 = vpack.c.b16 %v1085, %v1084
        %v1088 = vsel %vm595, %v1086, 0
        %1090 = vmatprep.subr.bf16.mxu0 %v1069
        %1091 = vmatpush1.bf16.msra.mxu0 %v1068
        %1092 = vmatprep.subr.bf16.mxu0 %v1071
        %1093 = vmatpush1.bf16.msra.mxu0 %v1070
        %1094 = vmatprep.subr.bf16.mxu0 %v1073
        %1095 = vmatpush1.bf16.msra.mxu0 %v1072
        %1096 = vmatprep.subr.bf16.mxu0 0
        %1097 = vmatpush1.bf16.msra.mxu0 0
        %1098 = vmatprep.subr.bf16.mxu0 0
        %1099 = vmatpush1.bf16.msra.mxu0 0
        %1100 = vmatprep.subr.bf16.mxu0 0
        %1101 = vmatpush1.bf16.msra.mxu0 0
        %1102 = vmatprep.subr.bf16.mxu0 0
        %1103 = vmatpush1.bf16.msra.mxu0 0
        %1104 = vmatprep.subr.bf16.mxu0 0
        %1105 = vmatpush1.bf16.msra.mxu0 0
        %1106 = vmatprep.subr.bf16.mxu0 0
        %1107 = vmatpush1.bf16.msra.mxu0 0
        %1108 = vmatprep.subr.bf16.mxu0 0
        %1109 = vmatpush1.bf16.msra.mxu0 0
        %1110 = vmatprep.subr.bf16.mxu0 0
        %1111 = vmatpush1.bf16.msra.mxu0 0
        %1112 = vmatprep.subr.bf16.mxu0 0
        %1113 = vmatpush1.bf16.msra.mxu0 0
        %1114 = vmatprep.subr.bf16.mxu0 0
        %1115 = vmatpush1.bf16.msra.mxu0 0
        %1116 = vmatprep.subr.bf16.mxu0 0
        %1117 = vmatpush1.bf16.msra.mxu0 0
        %1118 = vmatprep.subr.bf16.mxu0 0
        %1119 = vmatpush1.bf16.msra.mxu0 0
        %1120 = vmatprep.subr.bf16.mxu0 0
        %1121 = vmatpush1.bf16.msra.mxu0 0
        %1122 = vmatprep.mubr.bf16.mxu0 0
        %1123 = vmatmul.mubr.bf16.gmra.mrb[0].mxu0 %v1088
        %v1124 = vpop.f32.mrb[0].mxu0
        %v1125 = vadd.f32 %v1076, %v1124
        %v1126 = vpop.f32.mrb[0].mxu0
        %v1127 = vadd.f32 %v1076, %v1126
        %v1128 = vpop.f32.mrb[0].mxu0
        %v1129 = vadd.f32 %v1080, %v1128
        %v1130 = vpop.f32.mrb[0].mxu0
        %v1131 = vadd.f32 %v1080, %v1130
        %1132 = vdwg.mxu0
        %1133 = vrot.lane.b32.xlu0 %v1018, 127
        %v1134 = vpop.permute.xlu0 %1133
        %1135 = vrot.lane.b32.xlu0 %v1020, 127
        %v1136 = vpop.permute.xlu0 %1135
        %1137 = vrot.lane.b32.xlu0 %v1019, 127
        %v1138 = vpop.permute.xlu0 %1137
        %1139 = vrot.lane.b32.xlu0 %v1021, 127
        %v1140 = vpop.permute.xlu0 %1139
        %v1141 = vsel %vm501, %v1134, %v1138
        %v1142 = vsel %vm501, %v1136, %v1140
        %v1143 = vsel %vm501, %v1138, %v1134
        %v1144 = vsel %vm501, %v1140, %v1136
        %v1145 = vmul.f32 %v1141, %v507
        %v1146 = vmul.f32 %v1143, %v507
        %v1147 = vmul.f32 %v1142, %v507
        %v1148 = vmul.f32 %v1144, %v507
        %v1149 = vpack.c.bf16 %v1147, %v1145
        %v1150 = vpack.c.bf16 %v1148, %v1146
        %1151 = vmatprep.subr.bf16.mxu0 %v1071
        %1152 = vmatpush1.bf16.msra.mxu0 %v1070
        %1153 = vmatprep.subr.bf16.mxu0 %v1073
        %1154 = vmatpush1.bf16.msra.mxu0 %v1072
        %1155 = vmatprep.subr.bf16.mxu0 %v1150
        %1156 = vmatpush1.bf16.msra.mxu0 %v1149
        %1157 = vmatprep.subr.bf16.mxu0 0
        %1158 = vmatpush1.bf16.msra.mxu0 0
        %1159 = vmatprep.subr.bf16.mxu0 0
        %1160 = vmatpush1.bf16.msra.mxu0 0
        %1161 = vmatprep.subr.bf16.mxu0 0
        %1162 = vmatpush1.bf16.msra.mxu0 0
        %1163 = vmatprep.subr.bf16.mxu0 0
        %1164 = vmatpush1.bf16.msra.mxu0 0
        %1165 = vmatprep.subr.bf16.mxu0 0
        %1166 = vmatpush1.bf16.msra.mxu0 0
        %1167 = vmatprep.subr.bf16.mxu0 0
        %1168 = vmatpush1.bf16.msra.mxu0 0
        %1169 = vmatprep.subr.bf16.mxu0 0
        %1170 = vmatpush1.bf16.msra.mxu0 0
        %1171 = vmatprep.subr.bf16.mxu0 0
        %1172 = vmatpush1.bf16.msra.mxu0 0
        %1173 = vmatprep.subr.bf16.mxu0 0
        %1174 = vmatpush1.bf16.msra.mxu0 0
        %1175 = vmatprep.subr.bf16.mxu0 0
        %1176 = vmatpush1.bf16.msra.mxu0 0
        %1177 = vmatprep.subr.bf16.mxu0 0
        %1178 = vmatpush1.bf16.msra.mxu0 0
        %1179 = vmatprep.subr.bf16.mxu0 0
        %1180 = vmatpush1.bf16.msra.mxu0 0
        %1181 = vmatprep.subr.bf16.mxu0 0
        %1182 = vmatpush1.bf16.msra.mxu0 0
        %1183 = vmatprep.mubr.bf16.mxu0 0
        %1184 = vmatmul.mubr.bf16.gmra.mrb[0].mxu0 %v1088
        %v1185 = vpop.f32.mrb[0].mxu0
        %v1186 = vadd.f32 %v1076, %v1185
        %v1187 = vpop.f32.mrb[0].mxu0
        %v1188 = vadd.f32 %v1076, %v1187
        %v1189 = vpop.f32.mrb[0].mxu0
        %v1190 = vadd.f32 %v1080, %v1189
        %v1191 = vpop.f32.mrb[0].mxu0
        %v1192 = vadd.f32 %v1080, %v1191
        %1193 = vdwg.mxu0
        %1194 = vadd.xlane.f32.xlu0 %v1125
        %v1195 = vpop.xlane.xlu0 %1194
        %1196 = vadd.xlane.f32.xlu0 %v1129
        %v1197 = vpop.xlane.xlu0 %1196
        %1198 = vadd.xlane.f32.xlu0 %v1127
        %v1199 = vpop.xlane.xlu0 %1198
        %1200 = vadd.xlane.f32.xlu0 %v1131
        %v1201 = vpop.xlane.xlu0 %1200
        %v1202 = vsel %vm711, %v1195, %v1199
        %v1203 = vsel %vm711, %v1197, %v1201
        %1204 = vadd.xlane.f32.xlu0 %v1186
        %v1205 = vpop.xlane.xlu0 %1204
        %1206 = vadd.xlane.f32.xlu0 %v1190
        %v1207 = vpop.xlane.xlu0 %1206
        %1208 = vadd.xlane.f32.xlu0 %v1188
        %v1209 = vpop.xlane.xlu0 %1208
        %1210 = vadd.xlane.f32.xlu0 %v1192
        %v1211 = vpop.xlane.xlu0 %1210
        %v1212 = vsel %vm711, %v1205, %v1209
        %v1213 = vsel %vm711, %v1207, %v1211
        %v1214 = vadd.f32 %v1202, %v1212
        %v1215 = vadd.f32 %v1203, %v1213
        %1216 = vmatprep.subr.mxu0 0.0
        %1217 = vmatpush1.msra.mxu0 %v1214
        %1218 = vmatprep.subr.mxu0 0.0
        %1219 = vmatpush1.msra.mxu0 %v1215
        %1220 = vmatprep.subr.mxu0 0.0
        %1221 = vmatpush1.msra.mxu0 0.0
        %1222 = vmatprep.subr.mxu0 0.0
        %1223 = vmatpush1.msra.mxu0 0.0
        %1224 = vmatprep.subr.mxu0 0.0
        %1225 = vmatpush1.msra.mxu0 0.0
        %1226 = vmatprep.subr.mxu0 0.0
        %1227 = vmatpush1.msra.mxu0 0.0
        %1228 = vmatprep.subr.mxu0 0.0
        %1229 = vmatpush1.msra.mxu0 0.0
        %1230 = vmatprep.subr.mxu0 0.0
        %1231 = vmatpush1.msra.mxu0 0.0
        %1232 = vmatprep.subr.mxu0 0.0
        %1233 = vmatpush1.msra.mxu0 0.0
        %1234 = vmatprep.subr.mxu0 0.0
        %1235 = vmatpush1.msra.mxu0 0.0
        %1236 = vmatprep.subr.mxu0 0.0
        %1237 = vmatpush1.msra.mxu0 0.0
        %1238 = vmatprep.subr.mxu0 0.0
        %1239 = vmatpush1.msra.mxu0 0.0
        %1240 = vmatprep.subr.mxu0 0.0
        %1241 = vmatpush1.msra.mxu0 0.0
        %1242 = vmatprep.subr.mxu0 0.0
        %1243 = vmatpush1.msra.mxu0 0.0
        %1244 = vmatprep.subr.mxu0 0.0
        %1245 = vmatpush1.msra.mxu0 0.0
        %1246 = vmatprep.subr.mxu0 0.0
        %1247 = vmatpush1.msra.mxu0 0.0
        %1248 = vmatprep.subr.mxu0 0.0
        %1249 = vmatpush1.msra.mxu0 0.0
        %1250 = vmatprep.subr.mxu0 0.0
        %1251 = vmatpush1.msra.mxu0 0.0
        %1252 = vmatprep.subr.mxu0 0.0
        %1253 = vmatpush1.msra.mxu0 0.0
        %1254 = vmatprep.subr.mxu0 0.0
        %1255 = vmatpush1.msra.mxu0 0.0
        %1256 = vmatprep.subr.mxu0 0.0
        %1257 = vmatpush1.msra.mxu0 0.0
        %1258 = vmatprep.subr.mxu0 0.0
        %1259 = vmatpush1.msra.mxu0 0.0
        %1260 = vmatprep.subr.mxu0 0.0
        %1261 = vmatpush1.msra.mxu0 0.0
        %1262 = vmatprep.subr.mxu0 0.0
        %1263 = vmatpush1.msra.mxu0 0.0
        %1264 = vmatprep.subr.mxu0 0.0
        %1265 = vmatpush1.msra.mxu0 0.0
        %1266 = vmatprep.subr.mxu0 0.0
        %1267 = vmatpush1.msra.mxu0 0.0
        %1268 = vmatprep.subr.mxu0 0.0
        %1269 = vmatpush1.msra.mxu0 0.0
        %1270 = vmatprep.subr.mxu0 0.0
        %1271 = vmatpush1.msra.mxu0 0.0
        %1272 = vmatprep.subr.mxu0 0.0
        %1273 = vmatpush1.msra.mxu0 0.0
        %1274 = vmatprep.subr.mxu0 0.0
        %1275 = vmatpush1.msra.mxu0 0.0
        %1276 = vmatprep.subr.mxu0 0.0
        %1277 = vmatpush1.msra.mxu0 0.0
        %1278 = vmatprep.subr.mxu0 0.0
        %1279 = vmatpush1.msra.mxu0 0.0
        %1280 = vmatprep.mubr.f32.mxu0 0.0
        %1281 = vmatmul.mubr.f32.gmra.mrb[0].mxu0 %v729
        %v1282 = vpop.f32.mrb[0].mxu0
        %v1283 = vadd.f32 0.0, %v1282
        %v1284 = vpop.f32.mrb[0].mxu0
        %1285 = vmatprep.mubr.f32.mxu0 0.0
        %1286 = vmatmul.mubr.f32.gmra.mrb[0].mxu0 %v732
        %v1287 = vpop.f32.mrb[0].mxu0
        %v1288 = vadd.f32 0.0, %v1287
        %v1289 = vpop.f32.mrb[0].mxu0
        %1290 = vdwg.mxu0
        %1292 = vset.pattern.permute.xlu0 0
        %1293 = vperm.xlu0 %1292, %v1283
        %v1294 = vpop.permute.xlu0 %1293
        %1297 = vset.pattern.permute.xlu0 0
        %1298 = vperm.xlu0 %1297, %v1288
        %v1299 = vpop.permute.xlu0 %1298
        %1301 = vset.pattern.permute.xlu0 1
        %1302 = vperm.xlu0 %1301, %v1283
        %v1303 = vpop.permute.xlu0 %1302
        %1305 = vset.pattern.permute.xlu0 1
        %1306 = vperm.xlu0 %1305, %v1288
        %v1307 = vpop.permute.xlu0 %1306
        %v1309 = vsub.f32 %v1125, %v1294
        %v1310 = vsub.f32 %v1127, %v1303
        %v1311 = vsub.f32 %v1129, %v1299
        %v1312 = vsub.f32 %v1131, %v1307
        %v1313 = vsub.f32 %v1186, %v1294
        %v1314 = vsub.f32 %v1188, %v1303
        %v1315 = vsub.f32 %v1190, %v1299
        %v1316 = vsub.f32 %v1192, %v1307
        %v1317 = vmul.f32 %v1309, %v1309
        %v1318 = vmul.f32 %v1310, %v1310
        %v1319 = vmul.f32 %v1311, %v1311
        %v1320 = vmul.f32 %v1312, %v1312
        %1321 = vadd.xlane.f32.xlu0 %v1317
        %v1322 = vpop.xlane.xlu0 %1321
        %1323 = vadd.xlane.f32.xlu0 %v1319
        %v1324 = vpop.xlane.xlu0 %1323
        %1325 = vadd.xlane.f32.xlu0 %v1318
        %v1326 = vpop.xlane.xlu0 %1325
        %1327 = vadd.xlane.f32.xlu0 %v1320
        %v1328 = vpop.xlane.xlu0 %1327
        %v1329 = vsel %vm711, %v1322, %v1326
        %v1330 = vsel %vm711, %v1324, %v1328
        %v1331 = vmul.f32 %v1313, %v1313
        %v1332 = vmul.f32 %v1314, %v1314
        %v1333 = vmul.f32 %v1315, %v1315
        %v1334 = vmul.f32 %v1316, %v1316
        %1335 = vadd.xlane.f32.xlu0 %v1331
        %v1336 = vpop.xlane.xlu0 %1335
        %1337 = vadd.xlane.f32.xlu0 %v1333
        %v1338 = vpop.xlane.xlu0 %1337
        %1339 = vadd.xlane.f32.xlu0 %v1332
        %v1340 = vpop.xlane.xlu0 %1339
        %1341 = vadd.xlane.f32.xlu0 %v1334
        %v1342 = vpop.xlane.xlu0 %1341
        %v1343 = vsel %vm711, %v1336, %v1340
        %v1344 = vsel %vm711, %v1338, %v1342
        %v1345 = vadd.f32 %v1329, %v1343
        %v1346 = vadd.f32 %v1330, %v1344
        %1347 = vmatprep.subr.mxu0 0.0
        %1348 = vmatpush1.msra.mxu0 %v1345
        %1349 = vmatprep.subr.mxu0 0.0
        %1350 = vmatpush1.msra.mxu0 %v1346
        %1351 = vmatprep.subr.mxu0 0.0
        %1352 = vmatpush1.msra.mxu0 0.0
        %1353 = vmatprep.subr.mxu0 0.0
        %1354 = vmatpush1.msra.mxu0 0.0
        %1355 = vmatprep.subr.mxu0 0.0
        %1356 = vmatpush1.msra.mxu0 0.0
        %1357 = vmatprep.subr.mxu0 0.0
        %1358 = vmatpush1.msra.mxu0 0.0
        %1359 = vmatprep.subr.mxu0 0.0
        %1360 = vmatpush1.msra.mxu0 0.0
        %1361 = vmatprep.subr.mxu0 0.0
        %1362 = vmatpush1.msra.mxu0 0.0
        %1363 = vmatprep.subr.mxu0 0.0
        %1364 = vmatpush1.msra.mxu0 0.0
        %1365 = vmatprep.subr.mxu0 0.0
        %1366 = vmatpush1.msra.mxu0 0.0
        %1367 = vmatprep.subr.mxu0 0.0
        %1368 = vmatpush1.msra.mxu0 0.0
        %1369 = vmatprep.subr.mxu0 0.0
        %1370 = vmatpush1.msra.mxu0 0.0
        %1371 = vmatprep.subr.mxu0 0.0
        %1372 = vmatpush1.msra.mxu0 0.0
        %1373 = vmatprep.subr.mxu0 0.0
        %1374 = vmatpush1.msra.mxu0 0.0
        %1375 = vmatprep.subr.mxu0 0.0
        %1376 = vmatpush1.msra.mxu0 0.0
        %1377 = vmatprep.subr.mxu0 0.0
        %1378 = vmatpush1.msra.mxu0 0.0
        %1379 = vmatprep.subr.mxu0 0.0
        %1380 = vmatpush1.msra.mxu0 0.0
        %1381 = vmatprep.subr.mxu0 0.0
        %1382 = vmatpush1.msra.mxu0 0.0
        %1383 = vmatprep.subr.mxu0 0.0
        %1384 = vmatpush1.msra.mxu0 0.0
        %1385 = vmatprep.subr.mxu0 0.0
        %1386 = vmatpush1.msra.mxu0 0.0
        %1387 = vmatprep.subr.mxu0 0.0
        %1388 = vmatpush1.msra.mxu0 0.0
        %1389 = vmatprep.subr.mxu0 0.0
        %1390 = vmatpush1.msra.mxu0 0.0
        %1391 = vmatprep.subr.mxu0 0.0
        %1392 = vmatpush1.msra.mxu0 0.0
        %1393 = vmatprep.subr.mxu0 0.0
        %1394 = vmatpush1.msra.mxu0 0.0
        %1395 = vmatprep.subr.mxu0 0.0
        %1396 = vmatpush1.msra.mxu0 0.0
        %1397 = vmatprep.subr.mxu0 0.0
        %1398 = vmatpush1.msra.mxu0 0.0
        %1399 = vmatprep.subr.mxu0 0.0
        %1400 = vmatpush1.msra.mxu0 0.0
        %1401 = vmatprep.subr.mxu0 0.0
        %1402 = vmatpush1.msra.mxu0 0.0
        %1403 = vmatprep.subr.mxu0 0.0
        %1404 = vmatpush1.msra.mxu0 0.0
        %1405 = vmatprep.subr.mxu0 0.0
        %1406 = vmatpush1.msra.mxu0 0.0
        %1407 = vmatprep.subr.mxu0 0.0
        %1408 = vmatpush1.msra.mxu0 0.0
        %1409 = vmatprep.subr.mxu0 0.0
        %1410 = vmatpush1.msra.mxu0 0.0
        %1411 = vmatprep.mubr.f32.mxu0 0.0
        %1412 = vmatmul.mubr.f32.gmra.mrb[0].mxu0 %v729
        %v1413 = vpop.f32.mrb[0].mxu0
        %v1414 = vadd.f32 1e-05, %v1413
        %v1415 = vpop.f32.mrb[0].mxu0
        %1416 = vmatprep.mubr.f32.mxu0 0.0
        %1417 = vmatmul.mubr.f32.gmra.mrb[0].mxu0 %v732
        %v1418 = vpop.f32.mrb[0].mxu0
        %v1419 = vadd.f32 1e-05, %v1418
        %v1420 = vpop.f32.mrb[0].mxu0
        %1421 = vdwg.mxu0
        %v1422 = vrsqrt.pop %v1414
        %v1423 = vrsqrt.pop %v1419
        %1424 = vset.pattern.permute.xlu0 5
        %1425 = vperm.xlu0 %1424, %v429
        %v1426 = vpop.permute.xlu0 %1425
        %1428 = vset.pattern.permute.xlu0 5
        %1429 = vperm.xlu0 %1428, %v430
        %v1430 = vpop.permute.xlu0 %1429
        %v1432 = vmul.f32 %v1426, %v1422
        %v1433 = vmul.f32 %v1430, %v1423
        %1435 = vset.pattern.permute.xlu0 0
        %1436 = vperm.xlu0 %1435, %v1432
        %v1437 = vpop.permute.xlu0 %1436
        %1440 = vset.pattern.permute.xlu0 0
        %1441 = vperm.xlu0 %1440, %v1433
        %v1442 = vpop.permute.xlu0 %1441
        %1444 = vset.pattern.permute.xlu0 1
        %1445 = vperm.xlu0 %1444, %v1432
        %v1446 = vpop.permute.xlu0 %1445
        %1448 = vset.pattern.permute.xlu0 1
        %1449 = vperm.xlu0 %1448, %v1433
        %v1450 = vpop.permute.xlu0 %1449
        %v1452 = vmul.f32 %v1309, %v1437
        %v1453 = vmul.f32 %v1310, %v1446
        %v1454 = vmul.f32 %v1311, %v1442
        %v1455 = vmul.f32 %v1312, %v1450
        %1456 = vset.pattern.permute.xlu0 6
        %1457 = vperm.xlu0 %1456, %v429
        %v1458 = vpop.permute.xlu0 %1457
        %1460 = vset.pattern.permute.xlu0 6
        %1461 = vperm.xlu0 %1460, %v430
        %v1462 = vpop.permute.xlu0 %1461
        %v1464 = vadd.f32 %v1452, %v1458
        %v1465 = vadd.f32 %v1453, %v1458
        %v1466 = vadd.f32 %v1454, %v1462
        %v1467 = vadd.f32 %v1455, %v1462
        %v1468 = vmul.f32 %v1313, %v1437
        %v1469 = vmul.f32 %v1314, %v1446
        %v1470 = vmul.f32 %v1315, %v1442
        %v1471 = vmul.f32 %v1316, %v1450
        %v1472 = vadd.f32 %v1468, %v1458
        %v1473 = vadd.f32 %v1469, %v1458
        %v1474 = vadd.f32 %v1470, %v1462
        %v1475 = vadd.f32 %v1471, %v1462
        %v1476 = vxor.u32 %v1464, 2147483648
        %v1477 = vxor.u32 %v1465, 2147483648
        %v1478 = vxor.u32 %v1466, 2147483648
        %v1479 = vxor.u32 %v1467, 2147483648
        %v1480 = vmul.f32 %v1476, 1.442695
        %v1481 = vpow.pop %v1480
        %v1482 = vmul.f32 %v1477, 1.442695
        %v1483 = vpow.pop %v1482
        %v1484 = vmul.f32 %v1478, 1.442695
        %v1485 = vpow.pop %v1484
        %v1486 = vmul.f32 %v1479, 1.442695
        %v1487 = vpow.pop %v1486
        %v1488 = vadd.f32 %v1481, 1.0
        %v1489 = vadd.f32 %v1483, 1.0
        %v1490 = vadd.f32 %v1485, 1.0
        %v1491 = vadd.f32 %v1487, 1.0
        %v1492 = vrcp.pop %v1488
        %v1493 = vmul.f32 1.0, %v1492
        %v1494 = vrcp.pop %v1489
        %v1495 = vmul.f32 1.0, %v1494
        %v1496 = vrcp.pop %v1490
        %v1497 = vmul.f32 1.0, %v1496
        %v1498 = vrcp.pop %v1491
        %v1499 = vmul.f32 1.0, %v1498
        %v1500 = vmul.f32 %v1464, %v1493
        %v1501 = vmul.f32 %v1465, %v1495
        %v1502 = vmul.f32 %v1466, %v1497
        %v1503 = vmul.f32 %v1467, %v1499
        %v1504 = vxor.u32 %v1472, 2147483648
        %v1505 = vxor.u32 %v1473, 2147483648
        %v1506 = vxor.u32 %v1474, 2147483648
        %v1507 = vxor.u32 %v1475, 2147483648
        %v1508 = vmul.f32 %v1504, 1.442695
        %v1509 = vpow.pop %v1508
        %v1510 = vmul.f32 %v1505, 1.442695
        %v1511 = vpow.pop %v1510
        %v1512 = vmul.f32 %v1506, 1.442695
        %v1513 = vpow.pop %v1512
        %v1514 = vmul.f32 %v1507, 1.442695
        %v1515 = vpow.pop %v1514
        %v1516 = vadd.f32 %v1509, 1.0
        %v1517 = vadd.f32 %v1511, 1.0
        %v1518 = vadd.f32 %v1513, 1.0
        %v1519 = vadd.f32 %v1515, 1.0
        %v1520 = vrcp.pop %v1516
        %v1521 = vmul.f32 1.0, %v1520
        %v1522 = vrcp.pop %v1517
        %v1523 = vmul.f32 1.0, %v1522
        %v1524 = vrcp.pop %v1518
        %v1525 = vmul.f32 1.0, %v1524
        %v1526 = vrcp.pop %v1519
        %v1527 = vmul.f32 1.0, %v1526
        %v1528 = vmul.f32 %v1472, %v1521
        %v1529 = vmul.f32 %v1473, %v1523
        %v1530 = vmul.f32 %v1474, %v1525
        %v1531 = vmul.f32 %v1475, %v1527
        %1533 = vset.pattern.permute.xlu0 0
        %1534 = vperm.xlu0 %1533, %v421
        %v1535 = vpop.permute.xlu0 %1534
        %1538 = vset.pattern.permute.xlu0 0
        %1539 = vperm.xlu0 %1538, %v422
        %v1540 = vpop.permute.xlu0 %1539
        %1542 = vset.pattern.permute.xlu0 1
        %1543 = vperm.xlu0 %1542, %v421
        %v1544 = vpop.permute.xlu0 %1543
        %1546 = vset.pattern.permute.xlu0 1
        %1547 = vperm.xlu0 %1546, %v422
        %v1548 = vpop.permute.xlu0 %1547
        %v1550 = vadd.f32 %v1500, %v1535
        %v1551 = vadd.f32 %v1501, %v1544
        %v1552 = vadd.f32 %v1502, %v1540
        %v1553 = vadd.f32 %v1503, %v1548
        %1554 = vst [vmem:[%s403] sm:$0xff] %v1550
        %1555 = vst [vmem:[%s403 + $0x8] sm:$0xff] %v1551
        %1556 = vst [vmem:[%s403 + $0x20] sm:$0xff] %v1552
        %1557 = vst [vmem:[%s403 + $0x28] sm:$0xff] %v1553
        %v1558 = vadd.f32 %v1528, %v1535
        %v1559 = vadd.f32 %v1529, %v1544
        %v1560 = vadd.f32 %v1530, %v1540
        %v1561 = vadd.f32 %v1531, %v1548
        %1562 = vst [vmem:[%s403 + $0x10] sm:$0xff] %v1558
        %1563 = vst [vmem:[%s403 + $0x18] sm:$0xff] %v1559
        %1564 = vst [vmem:[%s403 + $0x30] sm:$0xff] %v1560
        %1565 = vst [vmem:[%s403 + $0x38] sm:$0xff] %v1561
        %s1566 = sand.u32 %s239, 1
        %s1567 = scalar_lea.sflag [#allocation4], %s1566
        %s1568 = sand.u32 %s239, 1
        %s1569 = smul.addr %s1568, 64
        %s1570 = scalar_lea.vmem [#allocation8], %s1569
        // Predicated region
        $region69: #{tpu_custom_call.1} parent=55 // pred_check
          %p1571 = pneg %p249
        $region70: #{tpu_custom_call.1} parent=55 // pred_check_branch
          %1573 = sbr.rel (%p1571) target = $region72
        $region71: #{tpu_custom_call.1} parent=55 // pred_region
          %s1575 = ssub.s32 1024, 1024
          %1576 = vsyncadd %s1567, %s1575
          %s1577 = smul.addr %s27, 8
          %s1578 = smul.addr %s1577, 128
          %s1579 = scalar_lea.hbm %s9, %s1578
          %s1580 = sshll.u32 %s1570, 4
          %s1581 = int_to_ptr.vmem [resolvable:$true] %s1580
          %1586 = dma.vmem_to_hbm [thread:$0]  %s1581, 1024, %s1579, %s1567, 512, 512, 32
        $region72: #{tpu_custom_call.1} parent=55 // pred_fallthru
          _
      $region56: #{tpu_custom_call.1} parent=5 // pred_fallthru
        _
      %p1587 = scmp.le.s32.totalorder 2, %s22
      // Predicated region
      $region73: #{tpu_custom_call.1} parent=5 // pred_check
        %p1588 = pneg %p1587
      $region74: #{tpu_custom_call.1} parent=5 // pred_check_branch
        %1590 = sbr.rel (%p1588) target = $region76
      $region75: #{tpu_custom_call.1} parent=5 // pred_region
        %s1591 = ssub.s32 %s22, 2
        // Predicated region
        $region77: #{tpu_custom_call.1} parent=75 // pred_check
          %p1592 = pneg %p255
        $region78: #{tpu_custom_call.1} parent=75 // pred_check_branch
          %1594 = sbr.rel (%p1592) target = $region80
        $region79: #{tpu_custom_call.1} parent=75 // pred_region
          %s1595 = sand.u32 %s240, 1
          %s1596 = scalar_lea.sflag [#allocation4], %s1595
          %s1597 = sand.u32 %s240, 1
          %s1598 = smul.addr %s1597, 64
          %s1599 = scalar_lea.vmem [#allocation8], %s1598
          %1600 = dma.done %s1596, 1024
        $region80: #{tpu_custom_call.1} parent=75 // pred_fallthru
          _
      $region76: #{tpu_custom_call.1} parent=5 // pred_fallthru
        _
    $region6: #{tpu_custom_call.1} parent=1 // loop_footer
      %s26 = sadd.s32 1, %s22
    $region7: #{tpu_custom_call.1} parent=1 // loop_footer_branch
      %21 = sbr.rel target = $region3
    $region8: #{tpu_custom_call.1} parent=1 // loop_exit
      _
    %1601 = vsyncpa [#allocation3], 1
    %s1602 = scalar_lea.sflag [#allocation3], 1
    %1603 = vsyncpa %s1602, 1
    %1604 = vsyncpa [#allocation6], 1
    %1605 = vsyncpa [#allocation4], 1
    %s1606 = scalar_lea.sflag [#allocation4], 1
    %1607 = vsyncpa %s1606, 1

</llo_original>
